<compile_context>
chip_gen: v7x
topology: tpu7x:2x2x1
jax: 0.10.0
libtpu: 0.0.40
codegen_flags: <defaults>
</compile_context>

<pallas_src>
import math

import jax
import jax.numpy as jnp
import numpy as np
from jax.experimental import pallas as pl
from jax.experimental.pallas import tpu as pltpu

LOG_LIK_C = math.log(math.sqrt(2.0 * math.pi))


def _gru_obs_kernel(idx_ref,                      # SMEM (N,) int32  row indices
                    h_hbm,                        # ANY  (B, H)      hidden state (aliased)
                    x_ref, m_ref, mrep_ref, p_ref,           # VMEM per-obs inputs
                    wcat_ref, bprep_ref, wi_ref, wh_ref, bi_ref, bh_ref,  # VMEM weights
                    hout_hbm,                     # ANY  (B, H)      output (same buffer as h_hbm)
                    loss_ref,                     # VMEM (N, D)
                    hbuf,                         # VMEM scratch (N, H)
                    gsem, ssem):                  # DMA sems (N,), (N,)
    N, D = x_ref.shape
    H = hbuf.shape[1]

    # ---- gather h[i_obs]: N tiny row DMAs, all in flight while we compute ----
    for i in range(N):                            # N is static and small
        pltpu.make_async_copy(h_hbm.at[pl.ds(idx_ref[i], 1)],
                              hbuf.at[pl.ds(i, 1)],
                              gsem.at[i]).start()

    # ---- loss + prep projection (independent of h, overlaps the gather) ------
    x = x_ref[...]
    m = m_ref[...]
    p = p_ref[...]
    mean = p[:, :D]
    logvar = p[:, D:]
    # error = (x - mean) / sigma, but with an EUP exp instead of a VPU divide.
    error = (x - mean) * jnp.exp(-0.5 * logvar)
    loss_ref[...] = 0.5 * ((error * error + logvar + 2.0 * LOG_LIK_C) * m)
    # TODO(synk): PyTorch's `assert not losses.sum() != losses.sum()` NaN guard
    # has no in-kernel equivalent; would be pl.debug_check under debug mode.

    # Single K=4D matmul against the stacked block-diagonal prep slab
    # (replaces four K=D matmuls):  relu(cat @ w_cat + b_prep)
    cat = jnp.concatenate([x, mean, logvar, error], axis=1)          # (N, 4D)
    prep = jnp.dot(cat, wcat_ref[...], preferred_element_type=jnp.float32)
    prep = jnp.maximum(prep + bprep_ref[...], 0.0)
    gru_in = prep * mrep_ref[...]                  # VPU mask, no MXU push

    # input-side GRU matmul does not need h either -> still overlapping gather
    gi = jnp.dot(gru_in, wi_ref[...], preferred_element_type=jnp.float32) + bi_ref[...]

    # ---- GRU cell (PyTorch nn.GRUCell semantics, gate order r, z, n) ----------
    for i in range(N):
        pltpu.make_async_copy(h_hbm.at[pl.ds(idx_ref[i], 1)],
                              hbuf.at[pl.ds(i, 1)],
                              gsem.at[i]).wait()
    h = hbuf[...]
    gh = jnp.dot(h, wh_ref[...], preferred_element_type=jnp.float32) + bh_ref[...]
    # NOTE: gate slices at lane offsets H/2H inside one <128-lane result cost a
    # couple of XLU shifts; per-gate matmuls would add MXU pushes at this size,
    # so the fused 3H matmul is kept.
    r = jax.nn.sigmoid(gi[:, 0:H] + gh[:, 0:H])
    z = jax.nn.sigmoid(gi[:, H:2 * H] + gh[:, H:2 * H])
    n = jnp.tanh(gi[:, 2 * H:3 * H] + r * gh[:, 2 * H:3 * H])
    h_new = (1.0 - z) * n + z * h

    # ---- scatter h_new rows back into the (aliased) hidden-state buffer ------
    hbuf[...] = h_new                             # reuse scratch as DMA source
    for i in range(N):
        pltpu.make_async_copy(hbuf.at[pl.ds(i, 1)],
                              hout_hbm.at[pl.ds(idx_ref[i], 1)],
                              ssem.at[i]).start()
    for i in range(N):
        pltpu.make_async_copy(hbuf.at[pl.ds(i, 1)],
                              hout_hbm.at[pl.ds(idx_ref[i], 1)],
                              ssem.at[i]).wait()


def prepare_params(params):
    """One-time repacking of PyTorch-layout parameters into MXU-friendly slabs.

    Call once (outside the ODE loop); the forward pass does no repacking.
    """
    D = params["input_size"]
    P = params["prep_hidden"]
    w_prep = params["w_prep"].astype(jnp.float32)                 # (D, 4, P)
    eye_d = jnp.eye(D, dtype=jnp.float32)
    # w_cat[k*D + d_in, e*P + p] = w_prep[d_in, k, p] * (d_in == e)
    w_cat = jnp.einsum("dkp,de->kdep", w_prep, eye_d).reshape(4 * D, D * P)
    return {
        "w_cat": w_cat,                                           # (4D, D*P)
        "b_prep": params["bias_prep"].reshape(1, D * P).astype(jnp.float32),
        "w_ih": params["weight_ih"].T.astype(jnp.float32),        # (D*P, 3H), gates [r|z|n]
        "w_hh": params["weight_hh"].T.astype(jnp.float32),        # (H, 3H)
        "b_ih": params["bias_ih"].reshape(1, -1).astype(jnp.float32),
        "b_hh": params["bias_hh"].reshape(1, -1).astype(jnp.float32),
    }


def gru_observation_cell_logvar(h, p_obs, X_obs, M_obs, i_obs, prepped):
    """Pallas-backed equivalent of GRUObservationCellLogvar.forward.

    `prepped` comes from prepare_params(). Returns (h_updated, losses);
    rows of h not listed in i_obs are untouched (in-place via aliasing).
    """
    N, D = X_obs.shape
    H = h.shape[1]
    P = prepped["w_cat"].shape[1] // D

    # Mask expansion M_rep[n, d*P + p] = M[n, d] on the VPU side (no MXU push).
    m_rep = jnp.repeat(M_obs, P, axis=1)                          # (N, D*P)

    smem = pl.BlockSpec(memory_space=pltpu.MemorySpace.SMEM)
    hbm = pl.BlockSpec(memory_space=pl.ANY)
    vmem = pl.BlockSpec(memory_space=pltpu.MemorySpace.VMEM)

    h_out, losses = pl.pallas_call(
        _gru_obs_kernel,
        out_shape=(jax.ShapeDtypeStruct(h.shape, jnp.float32),    # updated h (aliased)
                   jax.ShapeDtypeStruct((N, D), jnp.float32)),    # losses
        in_specs=[smem, hbm, vmem, vmem, vmem, vmem,
                  vmem, vmem, vmem, vmem, vmem, vmem],
        out_specs=(hbm, vmem),
        scratch_shapes=[pltpu.VMEM((N, H), jnp.float32),
                        pltpu.SemaphoreType.DMA((N,)),
                        pltpu.SemaphoreType.DMA((N,))],
        input_output_aliases={1: 0},     # h (input 1) updated in place -> output 0
    )(i_obs.astype(jnp.int32), h,
      X_obs, M_obs, m_rep, p_obs,
      prepped["w_cat"], prepped["b_prep"], prepped["w_ih"], prepped["w_hh"],
      prepped["b_ih"], prepped["b_hh"])
    return h_out, losses


# Donate h so the in-place row update really is in place (no XLA copy of h).
# NOTE: duplicate indices in i_obs have "one row wins" semantics, like the
# original .at[].set() version; PyTorch in-place indexed assignment matches
# only when indices are unique.
forward = jax.jit(gru_observation_cell_logvar, donate_argnums=(0,))


def _reference(h, p_obs, X_obs, M_obs, i_obs, params):
    """Pure-JAX transcription of the PyTorch forward, for verification."""
    D = params["input_size"]
    H = h.shape[1]
    hp = jax.lax.Precision.HIGHEST

    mean, logvar = p_obs[:, :D], p_obs[:, D:]
    sigma = jnp.exp(0.5 * logvar)
    error = (X_obs - mean) / sigma
    losses = 0.5 * ((error ** 2 + logvar + 2.0 * LOG_LIK_C) * M_obs)

    stacked = jnp.stack([X_obs, mean, logvar, error], axis=2)        # (N, D, 4)
    gru_in = jnp.einsum("ndk,dkp->ndp", stacked, params["w_prep"],
                        precision=hp) + params["bias_prep"]
    gru_in = jax.nn.relu(gru_in)
    gru_in = (gru_in * M_obs[:, :, None]).reshape(-1, D * params["prep_hidden"])

    h_obs = h[i_obs]
    gi = jnp.dot(gru_in, params["weight_ih"].T, precision=hp) + params["bias_ih"]
    gh = jnp.dot(h_obs, params["weight_hh"].T, precision=hp) + params["bias_hh"]
    r = jax.nn.sigmoid(gi[:, :H] + gh[:, :H])
    z = jax.nn.sigmoid(gi[:, H:2 * H] + gh[:, H:2 * H])
    n = jnp.tanh(gi[:, 2 * H:] + r * gh[:, 2 * H:])
    h_new = (1.0 - z) * n + z * h_obs
    return h.at[i_obs].set(h_new), losses


if __name__ == "__main__":
    D, P, H = 4, 4, 32        # input_size, prep_hidden, hidden_size
    B_total, N_obs = 8, 5

    key = jax.random.PRNGKey(0)
    ks = jax.random.split(key, 10)

    std = math.sqrt(2.0 / (4 + P))
    bound = 1.0 / math.sqrt(H)
    params = {
        "input_size": D,
        "prep_hidden": P,
        "w_prep": std * jax.random.normal(ks[0], (D, 4, P), jnp.float32),
        "bias_prep": 0.1 + jnp.zeros((D, P), jnp.float32),
        "weight_ih": jax.random.uniform(ks[1], (3 * H, P * D), jnp.float32, -bound, bound),
        "weight_hh": jax.random.uniform(ks[2], (3 * H, H), jnp.float32, -bound, bound),
        "bias_ih": jax.random.uniform(ks[3], (3 * H,), jnp.float32, -bound, bound),
        "bias_hh": jax.random.uniform(ks[4], (3 * H,), jnp.float32, -bound, bound),
    }

    h = jax.random.normal(ks[5], (B_total, H), jnp.float32)
    p_obs = jax.random.normal(ks[6], (N_obs, 2 * D), jnp.float32)
    X_obs = jax.random.normal(ks[7], (N_obs, D), jnp.float32)
    M_obs = (jax.random.uniform(ks[8], (N_obs, D)) > 0.3).astype(jnp.float32)
    i_obs = jnp.array([0, 2, 3, 5, 7], dtype=jnp.int32)

    # Pure-JAX reference, computed BEFORE h is donated to the fused kernel.
    h_ref, losses_ref = _reference(h, p_obs, X_obs, M_obs, i_obs, params)
    h_ref = np.asarray(h_ref)
    losses_ref = np.asarray(losses_ref)

    prepped = prepare_params(params)          # one-time repack, outside hot path
    h_out, losses = forward(h, p_obs, X_obs, M_obs, i_obs, prepped)
    jax.block_until_ready((h_out, losses))

    np.testing.assert_allclose(np.asarray(h_out), h_ref, rtol=5e-3, atol=5e-3)
    np.testing.assert_allclose(np.asarray(losses), losses_ref, rtol=5e-3, atol=5e-3)

    print("KERNEL_OK")
</pallas_src>

<mosaic_0001>
module attributes {stable_mosaic.version = 11 : i64} {
  func.func @_gru_obs_kernel(%arg0: memref<5xi32, #tpu.memory_space<smem>>, %arg1: memref<8x32xf32, #tpu.memory_space<any>>, %arg2: memref<5x4xf32, #tpu.memory_space<vmem>>, %arg3: memref<5x4xf32, #tpu.memory_space<vmem>>, %arg4: memref<5x16xf32, #tpu.memory_space<vmem>>, %arg5: memref<5x8xf32, #tpu.memory_space<vmem>>, %arg6: memref<16x16xf32, #tpu.memory_space<vmem>>, %arg7: memref<1x16xf32, #tpu.memory_space<vmem>>, %arg8: memref<16x96xf32, #tpu.memory_space<vmem>>, %arg9: memref<32x96xf32, #tpu.memory_space<vmem>>, %arg10: memref<1x96xf32, #tpu.memory_space<vmem>>, %arg11: memref<1x96xf32, #tpu.memory_space<vmem>>, %arg12: memref<8x32xf32, #tpu.memory_space<any>>, %arg13: memref<5x4xf32, #tpu.memory_space<vmem>>, %arg14: memref<5x32xf32, #tpu.memory_space<vmem>>, %arg15: memref<5x!tpu.dma_semaphore, #tpu.memory_space<semaphore_mem>>, %arg16: memref<5x!tpu.dma_semaphore, #tpu.memory_space<semaphore_mem>>) attributes {dimension_semantics = [], scalar_prefetch = 0 : i64, scratch_operands = 3 : i64, tpu.core_type = #tpu.core_type<tc>} {
    %c0 = arith.constant 0 : index
    %0 = memref.load %arg0[%c0] : memref<5xi32, #tpu.memory_space<smem>>
    %c0_i32 = arith.constant 0 : i32
    %c0_i32_0 = arith.constant 0 : i32
    %1 = tpu.memref_slice %arg1[%0, %c0_i32_0] : memref<8x32xf32, #tpu.memory_space<any>> -> memref<1x32xf32, #tpu.memory_space<any>>
    %c0_i32_1 = arith.constant 0 : i32
    %c0_i32_2 = arith.constant 0 : i32
    %2 = tpu.memref_slice %arg14[%c0_i32_1, %c0_i32_2] : memref<5x32xf32, #tpu.memory_space<vmem>> -> memref<1x32xf32, #tpu.memory_space<vmem>>
    %3 = tpu.memref_slice %arg15[%c0_i32] : memref<5x!tpu.dma_semaphore, #tpu.memory_space<semaphore_mem>> -> memref<1x!tpu.dma_semaphore, #tpu.memory_space<semaphore_mem>>
    %4 = tpu.memref_squeeze %3 : memref<1x!tpu.dma_semaphore, #tpu.memory_space<semaphore_mem>> -> memref<!tpu.dma_semaphore, #tpu.memory_space<semaphore_mem>>
    tpu.enqueue_dma source(%1 : memref<1x32xf32, #tpu.memory_space<any>>) target(%2 : memref<1x32xf32, #tpu.memory_space<vmem>>) target_semaphore(%4 : memref<!tpu.dma_semaphore, #tpu.memory_space<semaphore_mem>>)
    %c1 = arith.constant 1 : index
    %5 = memref.load %arg0[%c1] : memref<5xi32, #tpu.memory_space<smem>>
    %c1_i32 = arith.constant 1 : i32
    %c0_i32_3 = arith.constant 0 : i32
    %6 = tpu.memref_slice %arg1[%5, %c0_i32_3] : memref<8x32xf32, #tpu.memory_space<any>> -> memref<1x32xf32, #tpu.memory_space<any>>
    %c1_i32_4 = arith.constant 1 : i32
    %c0_i32_5 = arith.constant 0 : i32
    %7 = tpu.memref_slice %arg14[%c1_i32_4, %c0_i32_5] : memref<5x32xf32, #tpu.memory_space<vmem>> -> memref<1x32xf32, #tpu.memory_space<vmem>>
    %8 = tpu.memref_slice %arg15[%c1_i32] : memref<5x!tpu.dma_semaphore, #tpu.memory_space<semaphore_mem>> -> memref<1x!tpu.dma_semaphore, #tpu.memory_space<semaphore_mem>>
    %9 = tpu.memref_squeeze %8 : memref<1x!tpu.dma_semaphore, #tpu.memory_space<semaphore_mem>> -> memref<!tpu.dma_semaphore, #tpu.memory_space<semaphore_mem>>
    tpu.enqueue_dma source(%6 : memref<1x32xf32, #tpu.memory_space<any>>) target(%7 : memref<1x32xf32, #tpu.memory_space<vmem>>) target_semaphore(%9 : memref<!tpu.dma_semaphore, #tpu.memory_space<semaphore_mem>>)
    %c2 = arith.constant 2 : index
    %10 = memref.load %arg0[%c2] : memref<5xi32, #tpu.memory_space<smem>>
    %c2_i32 = arith.constant 2 : i32
    %c0_i32_6 = arith.constant 0 : i32
    %11 = tpu.memref_slice %arg1[%10, %c0_i32_6] : memref<8x32xf32, #tpu.memory_space<any>> -> memref<1x32xf32, #tpu.memory_space<any>>
    %c2_i32_7 = arith.constant 2 : i32
    %c0_i32_8 = arith.constant 0 : i32
    %12 = tpu.memref_slice %arg14[%c2_i32_7, %c0_i32_8] : memref<5x32xf32, #tpu.memory_space<vmem>> -> memref<1x32xf32, #tpu.memory_space<vmem>>
    %13 = tpu.memref_slice %arg15[%c2_i32] : memref<5x!tpu.dma_semaphore, #tpu.memory_space<semaphore_mem>> -> memref<1x!tpu.dma_semaphore, #tpu.memory_space<semaphore_mem>>
    %14 = tpu.memref_squeeze %13 : memref<1x!tpu.dma_semaphore, #tpu.memory_space<semaphore_mem>> -> memref<!tpu.dma_semaphore, #tpu.memory_space<semaphore_mem>>
    tpu.enqueue_dma source(%11 : memref<1x32xf32, #tpu.memory_space<any>>) target(%12 : memref<1x32xf32, #tpu.memory_space<vmem>>) target_semaphore(%14 : memref<!tpu.dma_semaphore, #tpu.memory_space<semaphore_mem>>)
    %c3 = arith.constant 3 : index
    %15 = memref.load %arg0[%c3] : memref<5xi32, #tpu.memory_space<smem>>
    %c3_i32 = arith.constant 3 : i32
    %c0_i32_9 = arith.constant 0 : i32
    %16 = tpu.memref_slice %arg1[%15, %c0_i32_9] : memref<8x32xf32, #tpu.memory_space<any>> -> memref<1x32xf32, #tpu.memory_space<any>>
    %c3_i32_10 = arith.constant 3 : i32
    %c0_i32_11 = arith.constant 0 : i32
    %17 = tpu.memref_slice %arg14[%c3_i32_10, %c0_i32_11] : memref<5x32xf32, #tpu.memory_space<vmem>> -> memref<1x32xf32, #tpu.memory_space<vmem>>
    %18 = tpu.memref_slice %arg15[%c3_i32] : memref<5x!tpu.dma_semaphore, #tpu.memory_space<semaphore_mem>> -> memref<1x!tpu.dma_semaphore, #tpu.memory_space<semaphore_mem>>
    %19 = tpu.memref_squeeze %18 : memref<1x!tpu.dma_semaphore, #tpu.memory_space<semaphore_mem>> -> memref<!tpu.dma_semaphore, #tpu.memory_space<semaphore_mem>>
    tpu.enqueue_dma source(%16 : memref<1x32xf32, #tpu.memory_space<any>>) target(%17 : memref<1x32xf32, #tpu.memory_space<vmem>>) target_semaphore(%19 : memref<!tpu.dma_semaphore, #tpu.memory_space<semaphore_mem>>)
    %c4 = arith.constant 4 : index
    %20 = memref.load %arg0[%c4] : memref<5xi32, #tpu.memory_space<smem>>
    %c4_i32 = arith.constant 4 : i32
    %c0_i32_12 = arith.constant 0 : i32
    %21 = tpu.memref_slice %arg1[%20, %c0_i32_12] : memref<8x32xf32, #tpu.memory_space<any>> -> memref<1x32xf32, #tpu.memory_space<any>>
    %c4_i32_13 = arith.constant 4 : i32
    %c0_i32_14 = arith.constant 0 : i32
    %22 = tpu.memref_slice %arg14[%c4_i32_13, %c0_i32_14] : memref<5x32xf32, #tpu.memory_space<vmem>> -> memref<1x32xf32, #tpu.memory_space<vmem>>
    %23 = tpu.memref_slice %arg15[%c4_i32] : memref<5x!tpu.dma_semaphore, #tpu.memory_space<semaphore_mem>> -> memref<1x!tpu.dma_semaphore, #tpu.memory_space<semaphore_mem>>
    %24 = tpu.memref_squeeze %23 : memref<1x!tpu.dma_semaphore, #tpu.memory_space<semaphore_mem>> -> memref<!tpu.dma_semaphore, #tpu.memory_space<semaphore_mem>>
    tpu.enqueue_dma source(%21 : memref<1x32xf32, #tpu.memory_space<any>>) target(%22 : memref<1x32xf32, #tpu.memory_space<vmem>>) target_semaphore(%24 : memref<!tpu.dma_semaphore, #tpu.memory_space<semaphore_mem>>)
    %c0_15 = arith.constant 0 : index
    %c0_16 = arith.constant 0 : index
    %25 = vector.load %arg2[%c0_15, %c0_16] : memref<5x4xf32, #tpu.memory_space<vmem>>, vector<5x4xf32>
    %c0_17 = arith.constant 0 : index
    %c0_18 = arith.constant 0 : index
    %26 = vector.load %arg3[%c0_17, %c0_18] : memref<5x4xf32, #tpu.memory_space<vmem>>, vector<5x4xf32>
    %c0_19 = arith.constant 0 : index
    %c0_20 = arith.constant 0 : index
    %27 = vector.load %arg5[%c0_19, %c0_20] : memref<5x8xf32, #tpu.memory_space<vmem>>, vector<5x8xf32>
    %28 = vector.extract_strided_slice %27 {offsets = [0, 0], sizes = [5, 4], strides = [1, 1]} : vector<5x8xf32> to vector<5x4xf32>
    %29 = vector.extract_strided_slice %27 {offsets = [0, 4], sizes = [5, 4], strides = [1, 1]} : vector<5x8xf32> to vector<5x4xf32>
    %30 = arith.subf %25, %28 : vector<5x4xf32>
    %cst = arith.constant -5.000000e-01 : f32
    %31 = vector.broadcast %cst : f32 to vector<5x4xf32>
    %32 = arith.mulf %31, %29 : vector<5x4xf32>
    %33 = math.exp %32 : vector<5x4xf32>
    %34 = arith.mulf %30, %33 : vector<5x4xf32>
    %35 = arith.mulf %34, %34 : vector<5x4xf32>
    %36 = arith.addf %35, %29 : vector<5x4xf32>
    %cst_21 = arith.constant 1.83787704 : f32
    %37 = vector.broadcast %cst_21 : f32 to vector<5x4xf32>
    %38 = arith.addf %36, %37 : vector<5x4xf32>
    %39 = arith.mulf %38, %26 : vector<5x4xf32>
    %cst_22 = arith.constant 5.000000e-01 : f32
    %40 = vector.broadcast %cst_22 : f32 to vector<5x4xf32>
    %41 = arith.mulf %40, %39 : vector<5x4xf32>
    %c0_23 = arith.constant 0 : index
    %c0_24 = arith.constant 0 : index
    %42 = vector.load %arg13[%c0_23, %c0_24] : memref<5x4xf32, #tpu.memory_space<vmem>>, vector<5x4xf32>
    tpu.vector_store %arg13[%c0_23, %c0_24], %41 {strides = array<i32>} : memref<5x4xf32, #tpu.memory_space<vmem>>, vector<5x4xf32>,
    %43 = tpu.concatenate %25, %28, %29, %34 in 1 : vector<5x4xf32>, vector<5x4xf32>, vector<5x4xf32>, vector<5x4xf32> -> vector<5x16xf32>
    %c0_25 = arith.constant 0 : index
    %c0_26 = arith.constant 0 : index
    %44 = vector.load %arg6[%c0_25, %c0_26] : memref<16x16xf32, #tpu.memory_space<vmem>>, vector<16x16xf32>
    %cst_27 = arith.constant dense<0.000000e+00> : vector<5x16xf32>
    %45 = tpu.matmul %43, %44, %cst_27 {dimension_numbers = #tpu.dot_dimension_numbers<[1], [0], [0], [1], [0, 0, 1, 1], [], []>} : vector<5x16xf32>, vector<16x16xf32>, vector<5x16xf32> -> vector<5x16xf32>
    %c0_28 = arith.constant 0 : index
    %c0_29 = arith.constant 0 : index
    %46 = vector.load %arg7[%c0_28, %c0_29] : memref<1x16xf32, #tpu.memory_space<vmem>>, vector<1x16xf32>
    %47 = vector.broadcast %46 : vector<1x16xf32> to vector<5x16xf32>
    %48 = arith.addf %45, %47 : vector<5x16xf32>
    %cst_30 = arith.constant 0.000000e+00 : f32
    %49 = vector.broadcast %cst_30 : f32 to vector<5x16xf32>
    %50 = arith.maximumf %48, %49 : vector<5x16xf32>
    %c0_31 = arith.constant 0 : index
    %c0_32 = arith.constant 0 : index
    %51 = vector.load %arg4[%c0_31, %c0_32] : memref<5x16xf32, #tpu.memory_space<vmem>>, vector<5x16xf32>
    %52 = arith.mulf %50, %51 : vector<5x16xf32>
    %c0_33 = arith.constant 0 : index
    %c0_34 = arith.constant 0 : index
    %53 = vector.load %arg8[%c0_33, %c0_34] : memref<16x96xf32, #tpu.memory_space<vmem>>, vector<16x96xf32>
    %cst_35 = arith.constant dense<0.000000e+00> : vector<5x96xf32>
    %54 = tpu.matmul %52, %53, %cst_35 {dimension_numbers = #tpu.dot_dimension_numbers<[1], [0], [0], [1], [0, 0, 1, 1], [], []>} : vector<5x16xf32>, vector<16x96xf32>, vector<5x96xf32> -> vector<5x96xf32>
    %c0_36 = arith.constant 0 : index
    %c0_37 = arith.constant 0 : index
    %55 = vector.load %arg10[%c0_36, %c0_37] : memref<1x96xf32, #tpu.memory_space<vmem>>, vector<1x96xf32>
    %56 = vector.broadcast %55 : vector<1x96xf32> to vector<5x96xf32>
    %57 = arith.addf %54, %56 : vector<5x96xf32>
    %c0_38 = arith.constant 0 : index
    %58 = memref.load %arg0[%c0_38] : memref<5xi32, #tpu.memory_space<smem>>
    %c0_i32_39 = arith.constant 0 : i32
    %c0_i32_40 = arith.constant 0 : i32
    %59 = tpu.memref_slice %arg1[%58, %c0_i32_40] : memref<8x32xf32, #tpu.memory_space<any>> -> memref<1x32xf32, #tpu.memory_space<any>>
    %c0_i32_41 = arith.constant 0 : i32
    %c0_i32_42 = arith.constant 0 : i32
    %60 = tpu.memref_slice %arg14[%c0_i32_41, %c0_i32_42] : memref<5x32xf32, #tpu.memory_space<vmem>> -> memref<1x32xf32, #tpu.memory_space<vmem>>
    %61 = tpu.memref_slice %arg15[%c0_i32_39] : memref<5x!tpu.dma_semaphore, #tpu.memory_space<semaphore_mem>> -> memref<1x!tpu.dma_semaphore, #tpu.memory_space<semaphore_mem>>
    %62 = tpu.memref_squeeze %61 : memref<1x!tpu.dma_semaphore, #tpu.memory_space<semaphore_mem>> -> memref<!tpu.dma_semaphore, #tpu.memory_space<semaphore_mem>>
    tpu.wait_dma2 semaphore(%62 : memref<!tpu.dma_semaphore, #tpu.memory_space<semaphore_mem>>) src(%59 : memref<1x32xf32, #tpu.memory_space<any>>) dst(%60 : memref<1x32xf32, #tpu.memory_space<vmem>>)
    %c1_43 = arith.constant 1 : index
    %63 = memref.load %arg0[%c1_43] : memref<5xi32, #tpu.memory_space<smem>>
    %c1_i32_44 = arith.constant 1 : i32
    %c0_i32_45 = arith.constant 0 : i32
    %64 = tpu.memref_slice %arg1[%63, %c0_i32_45] : memref<8x32xf32, #tpu.memory_space<any>> -> memref<1x32xf32, #tpu.memory_space<any>>
    %c1_i32_46 = arith.constant 1 : i32
    %c0_i32_47 = arith.constant 0 : i32
    %65 = tpu.memref_slice %arg14[%c1_i32_46, %c0_i32_47] : memref<5x32xf32, #tpu.memory_space<vmem>> -> memref<1x32xf32, #tpu.memory_space<vmem>>
    %66 = tpu.memref_slice %arg15[%c1_i32_44] : memref<5x!tpu.dma_semaphore, #tpu.memory_space<semaphore_mem>> -> memref<1x!tpu.dma_semaphore, #tpu.memory_space<semaphore_mem>>
    %67 = tpu.memref_squeeze %66 : memref<1x!tpu.dma_semaphore, #tpu.memory_space<semaphore_mem>> -> memref<!tpu.dma_semaphore, #tpu.memory_space<semaphore_mem>>
    tpu.wait_dma2 semaphore(%67 : memref<!tpu.dma_semaphore, #tpu.memory_space<semaphore_mem>>) src(%64 : memref<1x32xf32, #tpu.memory_space<any>>) dst(%65 : memref<1x32xf32, #tpu.memory_space<vmem>>)
    %c2_48 = arith.constant 2 : index
    %68 = memref.load %arg0[%c2_48] : memref<5xi32, #tpu.memory_space<smem>>
    %c2_i32_49 = arith.constant 2 : i32
    %c0_i32_50 = arith.constant 0 : i32
    %69 = tpu.memref_slice %arg1[%68, %c0_i32_50] : memref<8x32xf32, #tpu.memory_space<any>> -> memref<1x32xf32, #tpu.memory_space<any>>
    %c2_i32_51 = arith.constant 2 : i32
    %c0_i32_52 = arith.constant 0 : i32
    %70 = tpu.memref_slice %arg14[%c2_i32_51, %c0_i32_52] : memref<5x32xf32, #tpu.memory_space<vmem>> -> memref<1x32xf32, #tpu.memory_space<vmem>>
    %71 = tpu.memref_slice %arg15[%c2_i32_49] : memref<5x!tpu.dma_semaphore, #tpu.memory_space<semaphore_mem>> -> memref<1x!tpu.dma_semaphore, #tpu.memory_space<semaphore_mem>>
    %72 = tpu.memref_squeeze %71 : memref<1x!tpu.dma_semaphore, #tpu.memory_space<semaphore_mem>> -> memref<!tpu.dma_semaphore, #tpu.memory_space<semaphore_mem>>
    tpu.wait_dma2 semaphore(%72 : memref<!tpu.dma_semaphore, #tpu.memory_space<semaphore_mem>>) src(%69 : memref<1x32xf32, #tpu.memory_space<any>>) dst(%70 : memref<1x32xf32, #tpu.memory_space<vmem>>)
    %c3_53 = arith.constant 3 : index
    %73 = memref.load %arg0[%c3_53] : memref<5xi32, #tpu.memory_space<smem>>
    %c3_i32_54 = arith.constant 3 : i32
    %c0_i32_55 = arith.constant 0 : i32
    %74 = tpu.memref_slice %arg1[%73, %c0_i32_55] : memref<8x32xf32, #tpu.memory_space<any>> -> memref<1x32xf32, #tpu.memory_space<any>>
    %c3_i32_56 = arith.constant 3 : i32
    %c0_i32_57 = arith.constant 0 : i32
    %75 = tpu.memref_slice %arg14[%c3_i32_56, %c0_i32_57] : memref<5x32xf32, #tpu.memory_space<vmem>> -> memref<1x32xf32, #tpu.memory_space<vmem>>
    %76 = tpu.memref_slice %arg15[%c3_i32_54] : memref<5x!tpu.dma_semaphore, #tpu.memory_space<semaphore_mem>> -> memref<1x!tpu.dma_semaphore, #tpu.memory_space<semaphore_mem>>
    %77 = tpu.memref_squeeze %76 : memref<1x!tpu.dma_semaphore, #tpu.memory_space<semaphore_mem>> -> memref<!tpu.dma_semaphore, #tpu.memory_space<semaphore_mem>>
    tpu.wait_dma2 semaphore(%77 : memref<!tpu.dma_semaphore, #tpu.memory_space<semaphore_mem>>) src(%74 : memref<1x32xf32, #tpu.memory_space<any>>) dst(%75 : memref<1x32xf32, #tpu.memory_space<vmem>>)
    %c4_58 = arith.constant 4 : index
    %78 = memref.load %arg0[%c4_58] : memref<5xi32, #tpu.memory_space<smem>>
    %c4_i32_59 = arith.constant 4 : i32
    %c0_i32_60 = arith.constant 0 : i32
    %79 = tpu.memref_slice %arg1[%78, %c0_i32_60] : memref<8x32xf32, #tpu.memory_space<any>> -> memref<1x32xf32, #tpu.memory_space<any>>
    %c4_i32_61 = arith.constant 4 : i32
    %c0_i32_62 = arith.constant 0 : i32
    %80 = tpu.memref_slice %arg14[%c4_i32_61, %c0_i32_62] : memref<5x32xf32, #tpu.memory_space<vmem>> -> memref<1x32xf32, #tpu.memory_space<vmem>>
    %81 = tpu.memref_slice %arg15[%c4_i32_59] : memref<5x!tpu.dma_semaphore, #tpu.memory_space<semaphore_mem>> -> memref<1x!tpu.dma_semaphore, #tpu.memory_space<semaphore_mem>>
    %82 = tpu.memref_squeeze %81 : memref<1x!tpu.dma_semaphore, #tpu.memory_space<semaphore_mem>> -> memref<!tpu.dma_semaphore, #tpu.memory_space<semaphore_mem>>
    tpu.wait_dma2 semaphore(%82 : memref<!tpu.dma_semaphore, #tpu.memory_space<semaphore_mem>>) src(%79 : memref<1x32xf32, #tpu.memory_space<any>>) dst(%80 : memref<1x32xf32, #tpu.memory_space<vmem>>)
    %c0_63 = arith.constant 0 : index
    %c0_64 = arith.constant 0 : index
    %83 = vector.load %arg14[%c0_63, %c0_64] : memref<5x32xf32, #tpu.memory_space<vmem>>, vector<5x32xf32>
    %c0_65 = arith.constant 0 : index
    %c0_66 = arith.constant 0 : index
    %84 = vector.load %arg9[%c0_65, %c0_66] : memref<32x96xf32, #tpu.memory_space<vmem>>, vector<32x96xf32>
    %cst_67 = arith.constant dense<0.000000e+00> : vector<5x96xf32>
    %85 = tpu.matmul %83, %84, %cst_67 {dimension_numbers = #tpu.dot_dimension_numbers<[1], [0], [0], [1], [0, 0, 1, 1], [], []>} : vector<5x32xf32>, vector<32x96xf32>, vector<5x96xf32> -> vector<5x96xf32>
    %c0_68 = arith.constant 0 : index
    %c0_69 = arith.constant 0 : index
    %86 = vector.load %arg11[%c0_68, %c0_69] : memref<1x96xf32, #tpu.memory_space<vmem>>, vector<1x96xf32>
    %87 = vector.broadcast %86 : vector<1x96xf32> to vector<5x96xf32>
    %88 = arith.addf %85, %87 : vector<5x96xf32>
    %89 = vector.extract_strided_slice %57 {offsets = [0, 0], sizes = [5, 32], strides = [1, 1]} : vector<5x96xf32> to vector<5x32xf32>
    %90 = vector.extract_strided_slice %88 {offsets = [0, 0], sizes = [5, 32], strides = [1, 1]} : vector<5x96xf32> to vector<5x32xf32>
    %91 = arith.addf %89, %90 : vector<5x32xf32>
    %92 = arith.negf %91 : vector<5x32xf32>
    %93 = math.exp %92 : vector<5x32xf32>
    %cst_70 = arith.constant 1.000000e+00 : f32
    %94 = vector.broadcast %cst_70 : f32 to vector<5x32xf32>
    %95 = arith.addf %94, %93 : vector<5x32xf32>
    %96 = arith.divf %94, %95 : vector<5x32xf32>
    %97 = vector.extract_strided_slice %57 {offsets = [0, 32], sizes = [5, 32], strides = [1, 1]} : vector<5x96xf32> to vector<5x32xf32>
    %98 = vector.extract_strided_slice %88 {offsets = [0, 32], sizes = [5, 32], strides = [1, 1]} : vector<5x96xf32> to vector<5x32xf32>
    %99 = arith.addf %97, %98 : vector<5x32xf32>
    %100 = arith.negf %99 : vector<5x32xf32>
    %101 = math.exp %100 : vector<5x32xf32>
    %cst_71 = arith.constant 1.000000e+00 : f32
    %102 = vector.broadcast %cst_71 : f32 to vector<5x32xf32>
    %103 = arith.addf %102, %101 : vector<5x32xf32>
    %104 = arith.divf %102, %103 : vector<5x32xf32>
    %105 = vector.extract_strided_slice %57 {offsets = [0, 64], sizes = [5, 32], strides = [1, 1]} : vector<5x96xf32> to vector<5x32xf32>
    %106 = vector.extract_strided_slice %88 {offsets = [0, 64], sizes = [5, 32], strides = [1, 1]} : vector<5x96xf32> to vector<5x32xf32>
    %107 = arith.mulf %96, %106 : vector<5x32xf32>
    %108 = arith.addf %105, %107 : vector<5x32xf32>
    %109 = math.tanh %108 : vector<5x32xf32>
    %cst_72 = arith.constant 1.000000e+00 : f32
    %110 = vector.broadcast %cst_72 : f32 to vector<5x32xf32>
    %111 = arith.subf %110, %104 : vector<5x32xf32>
    %112 = arith.mulf %111, %109 : vector<5x32xf32>
    %113 = arith.mulf %104, %83 : vector<5x32xf32>
    %114 = arith.addf %112, %113 : vector<5x32xf32>
    %c0_73 = arith.constant 0 : index
    %c0_74 = arith.constant 0 : index
    %115 = vector.load %arg14[%c0_73, %c0_74] : memref<5x32xf32, #tpu.memory_space<vmem>>, vector<5x32xf32>
    tpu.vector_store %arg14[%c0_73, %c0_74], %114 {strides = array<i32>} : memref<5x32xf32, #tpu.memory_space<vmem>>, vector<5x32xf32>,
    %c0_75 = arith.constant 0 : index
    %116 = memref.load %arg0[%c0_75] : memref<5xi32, #tpu.memory_space<smem>>
    %c0_i32_76 = arith.constant 0 : i32
    %c0_i32_77 = arith.constant 0 : i32
    %c0_i32_78 = arith.constant 0 : i32
    %117 = tpu.memref_slice %arg14[%c0_i32_77, %c0_i32_78] : memref<5x32xf32, #tpu.memory_space<vmem>> -> memref<1x32xf32, #tpu.memory_space<vmem>>
    %c0_i32_79 = arith.constant 0 : i32
    %118 = tpu.memref_slice %arg12[%116, %c0_i32_79] : memref<8x32xf32, #tpu.memory_space<any>> -> memref<1x32xf32, #tpu.memory_space<any>>
    %119 = tpu.memref_slice %arg16[%c0_i32_76] : memref<5x!tpu.dma_semaphore, #tpu.memory_space<semaphore_mem>> -> memref<1x!tpu.dma_semaphore, #tpu.memory_space<semaphore_mem>>
    %120 = tpu.memref_squeeze %119 : memref<1x!tpu.dma_semaphore, #tpu.memory_space<semaphore_mem>> -> memref<!tpu.dma_semaphore, #tpu.memory_space<semaphore_mem>>
    tpu.enqueue_dma source(%117 : memref<1x32xf32, #tpu.memory_space<vmem>>) target(%118 : memref<1x32xf32, #tpu.memory_space<any>>) target_semaphore(%120 : memref<!tpu.dma_semaphore, #tpu.memory_space<semaphore_mem>>)
    %c1_80 = arith.constant 1 : index
    %121 = memref.load %arg0[%c1_80] : memref<5xi32, #tpu.memory_space<smem>>
    %c1_i32_81 = arith.constant 1 : i32
    %c1_i32_82 = arith.constant 1 : i32
    %c0_i32_83 = arith.constant 0 : i32
    %122 = tpu.memref_slice %arg14[%c1_i32_82, %c0_i32_83] : memref<5x32xf32, #tpu.memory_space<vmem>> -> memref<1x32xf32, #tpu.memory_space<vmem>>
    %c0_i32_84 = arith.constant 0 : i32
    %123 = tpu.memref_slice %arg12[%121, %c0_i32_84] : memref<8x32xf32, #tpu.memory_space<any>> -> memref<1x32xf32, #tpu.memory_space<any>>
    %124 = tpu.memref_slice %arg16[%c1_i32_81] : memref<5x!tpu.dma_semaphore, #tpu.memory_space<semaphore_mem>> -> memref<1x!tpu.dma_semaphore, #tpu.memory_space<semaphore_mem>>
    %125 = tpu.memref_squeeze %124 : memref<1x!tpu.dma_semaphore, #tpu.memory_space<semaphore_mem>> -> memref<!tpu.dma_semaphore, #tpu.memory_space<semaphore_mem>>
    tpu.enqueue_dma source(%122 : memref<1x32xf32, #tpu.memory_space<vmem>>) target(%123 : memref<1x32xf32, #tpu.memory_space<any>>) target_semaphore(%125 : memref<!tpu.dma_semaphore, #tpu.memory_space<semaphore_mem>>)
    %c2_85 = arith.constant 2 : index
    %126 = memref.load %arg0[%c2_85] : memref<5xi32, #tpu.memory_space<smem>>
    %c2_i32_86 = arith.constant 2 : i32
    %c2_i32_87 = arith.constant 2 : i32
    %c0_i32_88 = arith.constant 0 : i32
    %127 = tpu.memref_slice %arg14[%c2_i32_87, %c0_i32_88] : memref<5x32xf32, #tpu.memory_space<vmem>> -> memref<1x32xf32, #tpu.memory_space<vmem>>
    %c0_i32_89 = arith.constant 0 : i32
    %128 = tpu.memref_slice %arg12[%126, %c0_i32_89] : memref<8x32xf32, #tpu.memory_space<any>> -> memref<1x32xf32, #tpu.memory_space<any>>
    %129 = tpu.memref_slice %arg16[%c2_i32_86] : memref<5x!tpu.dma_semaphore, #tpu.memory_space<semaphore_mem>> -> memref<1x!tpu.dma_semaphore, #tpu.memory_space<semaphore_mem>>
    %130 = tpu.memref_squeeze %129 : memref<1x!tpu.dma_semaphore, #tpu.memory_space<semaphore_mem>> -> memref<!tpu.dma_semaphore, #tpu.memory_space<semaphore_mem>>
    tpu.enqueue_dma source(%127 : memref<1x32xf32, #tpu.memory_space<vmem>>) target(%128 : memref<1x32xf32, #tpu.memory_space<any>>) target_semaphore(%130 : memref<!tpu.dma_semaphore, #tpu.memory_space<semaphore_mem>>)
    %c3_90 = arith.constant 3 : index
    %131 = memref.load %arg0[%c3_90] : memref<5xi32, #tpu.memory_space<smem>>
    %c3_i32_91 = arith.constant 3 : i32
    %c3_i32_92 = arith.constant 3 : i32
    %c0_i32_93 = arith.constant 0 : i32
    %132 = tpu.memref_slice %arg14[%c3_i32_92, %c0_i32_93] : memref<5x32xf32, #tpu.memory_space<vmem>> -> memref<1x32xf32, #tpu.memory_space<vmem>>
    %c0_i32_94 = arith.constant 0 : i32
    %133 = tpu.memref_slice %arg12[%131, %c0_i32_94] : memref<8x32xf32, #tpu.memory_space<any>> -> memref<1x32xf32, #tpu.memory_space<any>>
    %134 = tpu.memref_slice %arg16[%c3_i32_91] : memref<5x!tpu.dma_semaphore, #tpu.memory_space<semaphore_mem>> -> memref<1x!tpu.dma_semaphore, #tpu.memory_space<semaphore_mem>>
    %135 = tpu.memref_squeeze %134 : memref<1x!tpu.dma_semaphore, #tpu.memory_space<semaphore_mem>> -> memref<!tpu.dma_semaphore, #tpu.memory_space<semaphore_mem>>
    tpu.enqueue_dma source(%132 : memref<1x32xf32, #tpu.memory_space<vmem>>) target(%133 : memref<1x32xf32, #tpu.memory_space<any>>) target_semaphore(%135 : memref<!tpu.dma_semaphore, #tpu.memory_space<semaphore_mem>>)
    %c4_95 = arith.constant 4 : index
    %136 = memref.load %arg0[%c4_95] : memref<5xi32, #tpu.memory_space<smem>>
    %c4_i32_96 = arith.constant 4 : i32
    %c4_i32_97 = arith.constant 4 : i32
    %c0_i32_98 = arith.constant 0 : i32
    %137 = tpu.memref_slice %arg14[%c4_i32_97, %c0_i32_98] : memref<5x32xf32, #tpu.memory_space<vmem>> -> memref<1x32xf32, #tpu.memory_space<vmem>>
    %c0_i32_99 = arith.constant 0 : i32
    %138 = tpu.memref_slice %arg12[%136, %c0_i32_99] : memref<8x32xf32, #tpu.memory_space<any>> -> memref<1x32xf32, #tpu.memory_space<any>>
    %139 = tpu.memref_slice %arg16[%c4_i32_96] : memref<5x!tpu.dma_semaphore, #tpu.memory_space<semaphore_mem>> -> memref<1x!tpu.dma_semaphore, #tpu.memory_space<semaphore_mem>>
    %140 = tpu.memref_squeeze %139 : memref<1x!tpu.dma_semaphore, #tpu.memory_space<semaphore_mem>> -> memref<!tpu.dma_semaphore, #tpu.memory_space<semaphore_mem>>
    tpu.enqueue_dma source(%137 : memref<1x32xf32, #tpu.memory_space<vmem>>) target(%138 : memref<1x32xf32, #tpu.memory_space<any>>) target_semaphore(%140 : memref<!tpu.dma_semaphore, #tpu.memory_space<semaphore_mem>>)
    %c0_100 = arith.constant 0 : index
    %141 = memref.load %arg0[%c0_100] : memref<5xi32, #tpu.memory_space<smem>>
    %c0_i32_101 = arith.constant 0 : i32
    %c0_i32_102 = arith.constant 0 : i32
    %c0_i32_103 = arith.constant 0 : i32
    %142 = tpu.memref_slice %arg14[%c0_i32_102, %c0_i32_103] : memref<5x32xf32, #tpu.memory_space<vmem>> -> memref<1x32xf32, #tpu.memory_space<vmem>>
    %c0_i32_104 = arith.constant 0 : i32
    %143 = tpu.memref_slice %arg12[%141, %c0_i32_104] : memref<8x32xf32, #tpu.memory_space<any>> -> memref<1x32xf32, #tpu.memory_space<any>>
    %144 = tpu.memref_slice %arg16[%c0_i32_101] : memref<5x!tpu.dma_semaphore, #tpu.memory_space<semaphore_mem>> -> memref<1x!tpu.dma_semaphore, #tpu.memory_space<semaphore_mem>>
    %145 = tpu.memref_squeeze %144 : memref<1x!tpu.dma_semaphore, #tpu.memory_space<semaphore_mem>> -> memref<!tpu.dma_semaphore, #tpu.memory_space<semaphore_mem>>
    tpu.wait_dma2 semaphore(%145 : memref<!tpu.dma_semaphore, #tpu.memory_space<semaphore_mem>>) src(%142 : memref<1x32xf32, #tpu.memory_space<vmem>>) dst(%143 : memref<1x32xf32, #tpu.memory_space<any>>)
    %c1_105 = arith.constant 1 : index
    %146 = memref.load %arg0[%c1_105] : memref<5xi32, #tpu.memory_space<smem>>
    %c1_i32_106 = arith.constant 1 : i32
    %c1_i32_107 = arith.constant 1 : i32
    %c0_i32_108 = arith.constant 0 : i32
    %147 = tpu.memref_slice %arg14[%c1_i32_107, %c0_i32_108] : memref<5x32xf32, #tpu.memory_space<vmem>> -> memref<1x32xf32, #tpu.memory_space<vmem>>
    %c0_i32_109 = arith.constant 0 : i32
    %148 = tpu.memref_slice %arg12[%146, %c0_i32_109] : memref<8x32xf32, #tpu.memory_space<any>> -> memref<1x32xf32, #tpu.memory_space<any>>
    %149 = tpu.memref_slice %arg16[%c1_i32_106] : memref<5x!tpu.dma_semaphore, #tpu.memory_space<semaphore_mem>> -> memref<1x!tpu.dma_semaphore, #tpu.memory_space<semaphore_mem>>
    %150 = tpu.memref_squeeze %149 : memref<1x!tpu.dma_semaphore, #tpu.memory_space<semaphore_mem>> -> memref<!tpu.dma_semaphore, #tpu.memory_space<semaphore_mem>>
    tpu.wait_dma2 semaphore(%150 : memref<!tpu.dma_semaphore, #tpu.memory_space<semaphore_mem>>) src(%147 : memref<1x32xf32, #tpu.memory_space<vmem>>) dst(%148 : memref<1x32xf32, #tpu.memory_space<any>>)
    %c2_110 = arith.constant 2 : index
    %151 = memref.load %arg0[%c2_110] : memref<5xi32, #tpu.memory_space<smem>>
    %c2_i32_111 = arith.constant 2 : i32
    %c2_i32_112 = arith.constant 2 : i32
    %c0_i32_113 = arith.constant 0 : i32
    %152 = tpu.memref_slice %arg14[%c2_i32_112, %c0_i32_113] : memref<5x32xf32, #tpu.memory_space<vmem>> -> memref<1x32xf32, #tpu.memory_space<vmem>>
    %c0_i32_114 = arith.constant 0 : i32
    %153 = tpu.memref_slice %arg12[%151, %c0_i32_114] : memref<8x32xf32, #tpu.memory_space<any>> -> memref<1x32xf32, #tpu.memory_space<any>>
    %154 = tpu.memref_slice %arg16[%c2_i32_111] : memref<5x!tpu.dma_semaphore, #tpu.memory_space<semaphore_mem>> -> memref<1x!tpu.dma_semaphore, #tpu.memory_space<semaphore_mem>>
    %155 = tpu.memref_squeeze %154 : memref<1x!tpu.dma_semaphore, #tpu.memory_space<semaphore_mem>> -> memref<!tpu.dma_semaphore, #tpu.memory_space<semaphore_mem>>
    tpu.wait_dma2 semaphore(%155 : memref<!tpu.dma_semaphore, #tpu.memory_space<semaphore_mem>>) src(%152 : memref<1x32xf32, #tpu.memory_space<vmem>>) dst(%153 : memref<1x32xf32, #tpu.memory_space<any>>)
    %c3_115 = arith.constant 3 : index
    %156 = memref.load %arg0[%c3_115] : memref<5xi32, #tpu.memory_space<smem>>
    %c3_i32_116 = arith.constant 3 : i32
    %c3_i32_117 = arith.constant 3 : i32
    %c0_i32_118 = arith.constant 0 : i32
    %157 = tpu.memref_slice %arg14[%c3_i32_117, %c0_i32_118] : memref<5x32xf32, #tpu.memory_space<vmem>> -> memref<1x32xf32, #tpu.memory_space<vmem>>
    %c0_i32_119 = arith.constant 0 : i32
    %158 = tpu.memref_slice %arg12[%156, %c0_i32_119] : memref<8x32xf32, #tpu.memory_space<any>> -> memref<1x32xf32, #tpu.memory_space<any>>
    %159 = tpu.memref_slice %arg16[%c3_i32_116] : memref<5x!tpu.dma_semaphore, #tpu.memory_space<semaphore_mem>> -> memref<1x!tpu.dma_semaphore, #tpu.memory_space<semaphore_mem>>
    %160 = tpu.memref_squeeze %159 : memref<1x!tpu.dma_semaphore, #tpu.memory_space<semaphore_mem>> -> memref<!tpu.dma_semaphore, #tpu.memory_space<semaphore_mem>>
    tpu.wait_dma2 semaphore(%160 : memref<!tpu.dma_semaphore, #tpu.memory_space<semaphore_mem>>) src(%157 : memref<1x32xf32, #tpu.memory_space<vmem>>) dst(%158 : memref<1x32xf32, #tpu.memory_space<any>>)
    %c4_120 = arith.constant 4 : index
    %161 = memref.load %arg0[%c4_120] : memref<5xi32, #tpu.memory_space<smem>>
    %c4_i32_121 = arith.constant 4 : i32
    %c4_i32_122 = arith.constant 4 : i32
    %c0_i32_123 = arith.constant 0 : i32
    %162 = tpu.memref_slice %arg14[%c4_i32_122, %c0_i32_123] : memref<5x32xf32, #tpu.memory_space<vmem>> -> memref<1x32xf32, #tpu.memory_space<vmem>>
    %c0_i32_124 = arith.constant 0 : i32
    %163 = tpu.memref_slice %arg12[%161, %c0_i32_124] : memref<8x32xf32, #tpu.memory_space<any>> -> memref<1x32xf32, #tpu.memory_space<any>>
    %164 = tpu.memref_slice %arg16[%c4_i32_121] : memref<5x!tpu.dma_semaphore, #tpu.memory_space<semaphore_mem>> -> memref<1x!tpu.dma_semaphore, #tpu.memory_space<semaphore_mem>>
    %165 = tpu.memref_squeeze %164 : memref<1x!tpu.dma_semaphore, #tpu.memory_space<semaphore_mem>> -> memref<!tpu.dma_semaphore, #tpu.memory_space<semaphore_mem>>
    tpu.wait_dma2 semaphore(%165 : memref<!tpu.dma_semaphore, #tpu.memory_space<semaphore_mem>>) src(%162 : memref<1x32xf32, #tpu.memory_space<vmem>>) dst(%163 : memref<1x32xf32, #tpu.memory_space<any>>)
    return
  }
}

</mosaic_0001>

<llo_original>
// kernel: gru_observation_cell_logvar.1
$region0: #{gru_observation_cell_logvar.1}
  #allocation0 [shape = 'u32[]', space=smem, size = 0x4, offset = 0x4, fixed_abs, tag = 'smem constant byte address 0x4 - core index']
  #allocation1 [shape = 'u32[144,128]{1,0:T(1,128)}', space=vmem, size = 0x12000, scoped, tag = 'internal scratch']
  #allocation2 [shape = 'f32[5,32]{1,0:T(8,128)}', space=vmem, size = 0x1000, scoped, tag = 'scratch operand']
  #allocation3 [shape = 's32[5]{0}', space=sflag, size = 0x14, scoped, tag = 'scratch operand']
  #allocation4 [shape = 's32[5]{0}', space=sflag, size = 0x14, scoped, tag = 'scratch operand']
  #allocation7 [shape = 's32[]', space=sflag, size = 0x4, offset = 0, fixed_abs, tag = 'sflag constant byte address 0x0 - dummy sync flag']
  #allocation8 [shape = 's32[]', space=sflag, size = 0x4, offset = 0, fixed_abs, tag = 'sflag constant byte address 0x0 - dummy sync flag']
  #allocation9 [shape = 's32[]', space=sflag, size = 0x4, offset = 0, fixed_abs, tag = 'sflag constant byte address 0x0 - dummy sync flag']
  #allocation10 [shape = 's32[]', space=sflag, size = 0x4, offset = 0, fixed_abs, tag = 'sflag constant byte address 0x0 - dummy sync flag']
  #allocation11 [shape = 's32[]', space=sflag, size = 0x4, offset = 0, fixed_abs, tag = 'sflag constant byte address 0x0 - dummy sync flag']
  #allocation12 [shape = 's32[]', space=sflag, size = 0x4, offset = 0, fixed_abs, tag = 'sflag constant byte address 0x0 - dummy sync flag']
  #allocation13 [shape = 's32[]', space=sflag, size = 0x4, offset = 0, fixed_abs, tag = 'sflag constant byte address 0x0 - dummy sync flag']
  #allocation14 [shape = 's32[]', space=sflag, size = 0x4, offset = 0, fixed_abs, tag = 'sflag constant byte address 0x0 - dummy sync flag']
  #allocation15 [shape = 's32[]', space=sflag, size = 0x4, offset = 0, fixed_abs, tag = 'sflag constant byte address 0x0 - dummy sync flag']
  #allocation16 [shape = 's32[]', space=sflag, size = 0x4, offset = 0, fixed_abs, tag = 'sflag constant byte address 0x0 - dummy sync flag']
  %s0 = inlined_call_operand.vmem [shape: s32[5], index: 0, kind: input, shape index: {}]
  %s1 = inlined_call_operand.vmem [shape: f32[8,32], index: 1, kind: input, shape index: {}, may-alias: {1,12}]
  %s2 = inlined_call_operand.vmem [shape: f32[5,4], index: 2, kind: input, shape index: {}]
  %s3 = inlined_call_operand.vmem [shape: f32[5,4], index: 3, kind: input, shape index: {}]
  %s4 = inlined_call_operand.vmem [shape: f32[5,16], index: 4, kind: input, shape index: {}]
  %s5 = inlined_call_operand.vmem [shape: f32[5,8], index: 5, kind: input, shape index: {}]
  %s6 = inlined_call_operand.vmem [shape: f32[16,16], index: 6, kind: input, shape index: {}]
  %s7 = inlined_call_operand.vmem [shape: f32[1,16], index: 7, kind: input, shape index: {}]
  %s8 = inlined_call_operand.vmem [shape: f32[16,96], index: 8, kind: input, shape index: {}]
  %s9 = inlined_call_operand.vmem [shape: f32[32,96], index: 9, kind: input, shape index: {}]
  %s10 = inlined_call_operand.vmem [shape: f32[1,96], index: 10, kind: input, shape index: {}]
  %s11 = inlined_call_operand.vmem [shape: f32[1,96], index: 11, kind: input, shape index: {}]
  %s12 = inlined_call_operand.vmem [shape: f32[8,32], index: 12, kind: output, shape index: {0}, may-alias: {1,12}]
  %s13 = inlined_call_operand.vmem [shape: f32[5,4], index: 13, kind: output, shape index: {1}]
  %14 = xla_tuple %s12, %s13
  %s15 = sld [smem:[#allocation0]]
  $region358: #{gru_observation_cell_logvar.1} parent=0
    _
  %s17 = ssub.s32 1, %s15
  %s18 = scalar_select 0, %s17, %s15
  $region1: #{gru_observation_cell_logvar.1} parent=0
    #allocation5 [shape = 'u8[512]{0}', space=smem, size = 0x200, scoped, tag = 'input window, operand 0, single buffered']
    #allocation6 [shape = 's32[1]{0}', space=sflag, size = 0x4, scoped, tag = 'scoped memory for gru_observation_cell_logvar.1']
    %19 = vsyncpa [#allocation6], 0
    // Predicated region
    $region2: #{gru_observation_cell_logvar.1} parent=1 // pred_check
      _
    $region3: #{gru_observation_cell_logvar.1} parent=1 // pred_check_branch
      %21 = sbr.rel (0) target = $region5
    $region4: #{gru_observation_cell_logvar.1} parent=1 // pred_region
      %s23 = ssub.s32 16, 16
      %24 = vsyncadd [#allocation6], %s23
      %s26 = sshll.u32 %s0, 4
      %s27 = int_to_ptr.vmem [resolvable:$true] %s26
      %29 = dma.vmem_to_smem %s27, 16, [#allocation5], [#allocation6]
    $region5: #{gru_observation_cell_logvar.1} parent=1 // pred_fallthru
      _
    // Predicated region
    $region6: #{gru_observation_cell_logvar.1} parent=1 // pred_check
      _
    $region7: #{gru_observation_cell_logvar.1} parent=1 // pred_check_branch
      %31 = sbr.rel (0) target = $region9
    $region8: #{gru_observation_cell_logvar.1} parent=1 // pred_region
      _
    $region9: #{gru_observation_cell_logvar.1} parent=1 // pred_fallthru
      _
    // Predicated region
    $region10: #{gru_observation_cell_logvar.1} parent=1 // pred_check
      _
    $region11: #{gru_observation_cell_logvar.1} parent=1 // pred_check_branch
      %33 = sbr.rel (0) target = $region13
    $region12: #{gru_observation_cell_logvar.1} parent=1 // pred_region
      _
    $region13: #{gru_observation_cell_logvar.1} parent=1 // pred_fallthru
      _
    // Predicated region
    $region14: #{gru_observation_cell_logvar.1} parent=1 // pred_check
      _
    $region15: #{gru_observation_cell_logvar.1} parent=1 // pred_check_branch
      %35 = sbr.rel (0) target = $region17
    $region16: #{gru_observation_cell_logvar.1} parent=1 // pred_region
      _
    $region17: #{gru_observation_cell_logvar.1} parent=1 // pred_fallthru
      _
    // Predicated region
    $region18: #{gru_observation_cell_logvar.1} parent=1 // pred_check
      _
    $region19: #{gru_observation_cell_logvar.1} parent=1 // pred_check_branch
      %37 = sbr.rel (0) target = $region21
    $region20: #{gru_observation_cell_logvar.1} parent=1 // pred_region
      _
    $region21: #{gru_observation_cell_logvar.1} parent=1 // pred_fallthru
      _
    // Predicated region
    $region22: #{gru_observation_cell_logvar.1} parent=1 // pred_check
      _
    $region23: #{gru_observation_cell_logvar.1} parent=1 // pred_check_branch
      %39 = sbr.rel (0) target = $region25
    $region24: #{gru_observation_cell_logvar.1} parent=1 // pred_region
      _
    $region25: #{gru_observation_cell_logvar.1} parent=1 // pred_fallthru
      _
    // Predicated region
    $region26: #{gru_observation_cell_logvar.1} parent=1 // pred_check
      _
    $region27: #{gru_observation_cell_logvar.1} parent=1 // pred_check_branch
      %41 = sbr.rel (0) target = $region29
    $region28: #{gru_observation_cell_logvar.1} parent=1 // pred_region
      _
    $region29: #{gru_observation_cell_logvar.1} parent=1 // pred_fallthru
      _
    // Predicated region
    $region30: #{gru_observation_cell_logvar.1} parent=1 // pred_check
      _
    $region31: #{gru_observation_cell_logvar.1} parent=1 // pred_check_branch
      %43 = sbr.rel (0) target = $region33
    $region32: #{gru_observation_cell_logvar.1} parent=1 // pred_region
      _
    $region33: #{gru_observation_cell_logvar.1} parent=1 // pred_fallthru
      _
    // Predicated region
    $region34: #{gru_observation_cell_logvar.1} parent=1 // pred_check
      _
    $region35: #{gru_observation_cell_logvar.1} parent=1 // pred_check_branch
      %45 = sbr.rel (0) target = $region37
    $region36: #{gru_observation_cell_logvar.1} parent=1 // pred_region
      _
    $region37: #{gru_observation_cell_logvar.1} parent=1 // pred_fallthru
      _
    // Predicated region
    $region38: #{gru_observation_cell_logvar.1} parent=1 // pred_check
      _
    $region39: #{gru_observation_cell_logvar.1} parent=1 // pred_check_branch
      %47 = sbr.rel (0) target = $region41
    $region40: #{gru_observation_cell_logvar.1} parent=1 // pred_region
      _
    $region41: #{gru_observation_cell_logvar.1} parent=1 // pred_fallthru
      _
    // Predicated region
    $region42: #{gru_observation_cell_logvar.1} parent=1 // pred_check
      _
    $region43: #{gru_observation_cell_logvar.1} parent=1 // pred_check_branch
      %49 = sbr.rel (0) target = $region45
    $region44: #{gru_observation_cell_logvar.1} parent=1 // pred_region
      _
    $region45: #{gru_observation_cell_logvar.1} parent=1 // pred_fallthru
      _
    // Predicated region
    $region46: #{gru_observation_cell_logvar.1} parent=1 // pred_check
      _
    $region47: #{gru_observation_cell_logvar.1} parent=1 // pred_check_branch
      %51 = sbr.rel (0) target = $region49
    $region48: #{gru_observation_cell_logvar.1} parent=1 // pred_region
      %52 = dma.done [#allocation6], 16
    $region49: #{gru_observation_cell_logvar.1} parent=1 // pred_fallthru
      _
    %53 = sfence
    %s54 = sld [smem:[#allocation5]]
    %s55 = scalar_lea.vmem %s1, %s54
    %p57 = scmp.lt.u32.totalorder 1, 8
    %p58 = pneg %p57
    // Predicated region
    $region50: #{gru_observation_cell_logvar.1} parent=1 // pred_check
      _
    $region51: #{gru_observation_cell_logvar.1} parent=1 // pred_check_branch
      %60 = sbr.rel (%p57) target = $region53
    $region52: #{gru_observation_cell_logvar.1} parent=1 // pred_region
      %s75 = sand.u32 1, 7
      %p76 = scmp.eq.s32.totalorder %s75, 0
      %p77 = pneg %p76
      // Predicated region
      $region65: #{gru_observation_cell_logvar.1} parent=52 // pred_check
        _
      $region66: #{gru_observation_cell_logvar.1} parent=52 // pred_check_branch
        %79 = sbr.rel (%p76) target = $region68
      $region67: #{gru_observation_cell_logvar.1} parent=52 // pred_region
        %s80 = sand.u32 1, 7
        %s81 = ssub.s32 1, %s80
        %s82 = scalar_lea.vmem %s55, %s81
        %s83 = ssub.s32 1, %s80
        %s84 = scalar_lea.vmem [#allocation2], %s83
        %s85 = sshllo.u32 0, %s80
        loop: start=0, step=1, limit=1
        $region69: #{gru_observation_cell_logvar.1} parent=67 // loop_pre_header
          _
        $region70: #{gru_observation_cell_logvar.1} parent=67 // loop_header
          %s87 = sphi 0, %s91
          %p88 = scmp.ge.s32.totalorder %s87, 1
          %s92 = sphi %s82, %s82
          %s93 = sphi %s84, %s84
        $region71: #{gru_observation_cell_logvar.1} parent=67 // loop_header_branch
          %90 = sbr.rel (%p88) target = $region75
        $region72: #{gru_observation_cell_logvar.1} parent=67 // loop_body
          %v94 = vld [vmem:[%s92] sm:%s85]
          %95 = vst [vmem:[%s93] sm:%s85] %v94
        $region73: #{gru_observation_cell_logvar.1} parent=67 // loop_footer
          %s91 = sadd.s32 1, %s87
        $region74: #{gru_observation_cell_logvar.1} parent=67 // loop_footer_branch
          %86 = sbr.rel target = $region70
        $region75: #{gru_observation_cell_logvar.1} parent=67 // loop_exit
          _
      $region68: #{gru_observation_cell_logvar.1} parent=52 // pred_fallthru
        _
    $region53: #{gru_observation_cell_logvar.1} parent=1 // pred_fallthru
      _
    // Predicated region
    $region54: #{gru_observation_cell_logvar.1} parent=1 // pred_check
      %p61 = pneg %p57
    $region55: #{gru_observation_cell_logvar.1} parent=1 // pred_check_branch
      %63 = sbr.rel (%p61) target = $region57
    $region56: #{gru_observation_cell_logvar.1} parent=1 // pred_region
      %s64 = sshllo.u32 0, 1
      loop: start=0, step=1, limit=1
      $region58: #{gru_observation_cell_logvar.1} parent=56 // loop_pre_header
        _
      $region59: #{gru_observation_cell_logvar.1} parent=56 // loop_header
        %s66 = sphi 0, %s70
        %p67 = scmp.ge.s32.totalorder %s66, 1
        %s71 = sphi %s55, %s55
        %s72 = sphi [#allocation2], [#allocation2]
      $region60: #{gru_observation_cell_logvar.1} parent=56 // loop_header_branch
        %69 = sbr.rel (%p67) target = $region64
      $region61: #{gru_observation_cell_logvar.1} parent=56 // loop_body
        %v73 = vld [vmem:[%s71] sm:%s64]
        %74 = vst [vmem:[%s72] sm:%s64] %v73
      $region62: #{gru_observation_cell_logvar.1} parent=56 // loop_footer
        %s70 = sadd.s32 1, %s66
      $region63: #{gru_observation_cell_logvar.1} parent=56 // loop_footer_branch
        %65 = sbr.rel target = $region59
      $region64: #{gru_observation_cell_logvar.1} parent=56 // loop_exit
        _
    $region57: #{gru_observation_cell_logvar.1} parent=1 // pred_fallthru
      _
    // Predicated region
    $region76: #{gru_observation_cell_logvar.1} parent=1 // pred_check
      _
    $region77: #{gru_observation_cell_logvar.1} parent=1 // pred_check_branch
      %98 = sbr.rel (0) target = $region79
    $region78: #{gru_observation_cell_logvar.1} parent=1 // pred_region
      %99 = vsyncadd [#allocation3], 16
    $region79: #{gru_observation_cell_logvar.1} parent=1 // pred_fallthru
      _
    %s100 = sld [smem:[#allocation5 + $0x1]]
    %s101 = scalar_lea.vmem %s1, %s100
    %s102 = scalar_lea.vmem [#allocation2], 1
    %s103 = scalar_lea.sflag [#allocation3], 1
    %p105 = scmp.lt.u32.totalorder 1, 8
    %p106 = pneg %p105
    // Predicated region
    $region80: #{gru_observation_cell_logvar.1} parent=1 // pred_check
      _
    $region81: #{gru_observation_cell_logvar.1} parent=1 // pred_check_branch
      %108 = sbr.rel (%p105) target = $region83
    $region82: #{gru_observation_cell_logvar.1} parent=1 // pred_region
      %s123 = sand.u32 1, 7
      %p124 = scmp.eq.s32.totalorder %s123, 0
      %p125 = pneg %p124
      // Predicated region
      $region95: #{gru_observation_cell_logvar.1} parent=82 // pred_check
        _
      $region96: #{gru_observation_cell_logvar.1} parent=82 // pred_check_branch
        %127 = sbr.rel (%p124) target = $region98
      $region97: #{gru_observation_cell_logvar.1} parent=82 // pred_region
        %s128 = sand.u32 1, 7
        %s129 = ssub.s32 1, %s128
        %s130 = scalar_lea.vmem %s101, %s129
        %s131 = ssub.s32 1, %s128
        %s132 = scalar_lea.vmem %s102, %s131 [#allocation2]
        %s133 = sshllo.u32 0, %s128
        loop: start=0, step=1, limit=1
        $region99: #{gru_observation_cell_logvar.1} parent=97 // loop_pre_header
          _
        $region100: #{gru_observation_cell_logvar.1} parent=97 // loop_header
          %s135 = sphi 0, %s139
          %p136 = scmp.ge.s32.totalorder %s135, 1
          %s140 = sphi %s130, %s130
          %s141 = sphi %s132, %s132
        $region101: #{gru_observation_cell_logvar.1} parent=97 // loop_header_branch
          %138 = sbr.rel (%p136) target = $region105
        $region102: #{gru_observation_cell_logvar.1} parent=97 // loop_body
          %v142 = vld [vmem:[%s140] sm:%s133]
          %143 = vst [vmem:[%s141] sm:%s133] %v142
        $region103: #{gru_observation_cell_logvar.1} parent=97 // loop_footer
          %s139 = sadd.s32 1, %s135
        $region104: #{gru_observation_cell_logvar.1} parent=97 // loop_footer_branch
          %134 = sbr.rel target = $region100
        $region105: #{gru_observation_cell_logvar.1} parent=97 // loop_exit
          _
      $region98: #{gru_observation_cell_logvar.1} parent=82 // pred_fallthru
        _
    $region83: #{gru_observation_cell_logvar.1} parent=1 // pred_fallthru
      _
    // Predicated region
    $region84: #{gru_observation_cell_logvar.1} parent=1 // pred_check
      %p109 = pneg %p105
    $region85: #{gru_observation_cell_logvar.1} parent=1 // pred_check_branch
      %111 = sbr.rel (%p109) target = $region87
    $region86: #{gru_observation_cell_logvar.1} parent=1 // pred_region
      %s112 = sshllo.u32 0, 1
      loop: start=0, step=1, limit=1
      $region88: #{gru_observation_cell_logvar.1} parent=86 // loop_pre_header
        _
      $region89: #{gru_observation_cell_logvar.1} parent=86 // loop_header
        %s114 = sphi 0, %s118
        %p115 = scmp.ge.s32.totalorder %s114, 1
        %s119 = sphi %s101, %s101
        %s120 = sphi %s102, %s102
      $region90: #{gru_observation_cell_logvar.1} parent=86 // loop_header_branch
        %117 = sbr.rel (%p115) target = $region94
      $region91: #{gru_observation_cell_logvar.1} parent=86 // loop_body
        %v121 = vld [vmem:[%s119] sm:%s112]
        %122 = vst [vmem:[%s120] sm:%s112] %v121
      $region92: #{gru_observation_cell_logvar.1} parent=86 // loop_footer
        %s118 = sadd.s32 1, %s114
      $region93: #{gru_observation_cell_logvar.1} parent=86 // loop_footer_branch
        %113 = sbr.rel target = $region89
      $region94: #{gru_observation_cell_logvar.1} parent=86 // loop_exit
        _
    $region87: #{gru_observation_cell_logvar.1} parent=1 // pred_fallthru
      _
    // Predicated region
    $region106: #{gru_observation_cell_logvar.1} parent=1 // pred_check
      _
    $region107: #{gru_observation_cell_logvar.1} parent=1 // pred_check_branch
      %146 = sbr.rel (0) target = $region109
    $region108: #{gru_observation_cell_logvar.1} parent=1 // pred_region
      %147 = vsyncadd %s103, 16
    $region109: #{gru_observation_cell_logvar.1} parent=1 // pred_fallthru
      _
    %s148 = sld [smem:[#allocation5 + $0x2]]
    %s149 = scalar_lea.vmem %s1, %s148
    %s150 = scalar_lea.vmem [#allocation2], 2
    %s151 = scalar_lea.sflag [#allocation3], 2
    %p153 = scmp.lt.u32.totalorder 1, 8
    %p154 = pneg %p153
    // Predicated region
    $region110: #{gru_observation_cell_logvar.1} parent=1 // pred_check
      _
    $region111: #{gru_observation_cell_logvar.1} parent=1 // pred_check_branch
      %156 = sbr.rel (%p153) target = $region113
    $region112: #{gru_observation_cell_logvar.1} parent=1 // pred_region
      %s171 = sand.u32 1, 7
      %p172 = scmp.eq.s32.totalorder %s171, 0
      %p173 = pneg %p172
      // Predicated region
      $region125: #{gru_observation_cell_logvar.1} parent=112 // pred_check
        _
      $region126: #{gru_observation_cell_logvar.1} parent=112 // pred_check_branch
        %175 = sbr.rel (%p172) target = $region128
      $region127: #{gru_observation_cell_logvar.1} parent=112 // pred_region
        %s176 = sand.u32 1, 7
        %s177 = ssub.s32 1, %s176
        %s178 = scalar_lea.vmem %s149, %s177
        %s179 = ssub.s32 1, %s176
        %s180 = scalar_lea.vmem %s150, %s179 [#allocation2]
        %s181 = sshllo.u32 0, %s176
        loop: start=0, step=1, limit=1
        $region129: #{gru_observation_cell_logvar.1} parent=127 // loop_pre_header
          _
        $region130: #{gru_observation_cell_logvar.1} parent=127 // loop_header
          %s183 = sphi 0, %s187
          %p184 = scmp.ge.s32.totalorder %s183, 1
          %s188 = sphi %s178, %s178
          %s189 = sphi %s180, %s180
        $region131: #{gru_observation_cell_logvar.1} parent=127 // loop_header_branch
          %186 = sbr.rel (%p184) target = $region135
        $region132: #{gru_observation_cell_logvar.1} parent=127 // loop_body
          %v190 = vld [vmem:[%s188] sm:%s181]
          %191 = vst [vmem:[%s189] sm:%s181] %v190
        $region133: #{gru_observation_cell_logvar.1} parent=127 // loop_footer
          %s187 = sadd.s32 1, %s183
        $region134: #{gru_observation_cell_logvar.1} parent=127 // loop_footer_branch
          %182 = sbr.rel target = $region130
        $region135: #{gru_observation_cell_logvar.1} parent=127 // loop_exit
          _
      $region128: #{gru_observation_cell_logvar.1} parent=112 // pred_fallthru
        _
    $region113: #{gru_observation_cell_logvar.1} parent=1 // pred_fallthru
      _
    // Predicated region
    $region114: #{gru_observation_cell_logvar.1} parent=1 // pred_check
      %p157 = pneg %p153
    $region115: #{gru_observation_cell_logvar.1} parent=1 // pred_check_branch
      %159 = sbr.rel (%p157) target = $region117
    $region116: #{gru_observation_cell_logvar.1} parent=1 // pred_region
      %s160 = sshllo.u32 0, 1
      loop: start=0, step=1, limit=1
      $region118: #{gru_observation_cell_logvar.1} parent=116 // loop_pre_header
        _
      $region119: #{gru_observation_cell_logvar.1} parent=116 // loop_header
        %s162 = sphi 0, %s166
        %p163 = scmp.ge.s32.totalorder %s162, 1
        %s167 = sphi %s149, %s149
        %s168 = sphi %s150, %s150
      $region120: #{gru_observation_cell_logvar.1} parent=116 // loop_header_branch
        %165 = sbr.rel (%p163) target = $region124
      $region121: #{gru_observation_cell_logvar.1} parent=116 // loop_body
        %v169 = vld [vmem:[%s167] sm:%s160]
        %170 = vst [vmem:[%s168] sm:%s160] %v169
      $region122: #{gru_observation_cell_logvar.1} parent=116 // loop_footer
        %s166 = sadd.s32 1, %s162
      $region123: #{gru_observation_cell_logvar.1} parent=116 // loop_footer_branch
        %161 = sbr.rel target = $region119
      $region124: #{gru_observation_cell_logvar.1} parent=116 // loop_exit
        _
    $region117: #{gru_observation_cell_logvar.1} parent=1 // pred_fallthru
      _
    // Predicated region
    $region136: #{gru_observation_cell_logvar.1} parent=1 // pred_check
      _
    $region137: #{gru_observation_cell_logvar.1} parent=1 // pred_check_branch
      %194 = sbr.rel (0) target = $region139
    $region138: #{gru_observation_cell_logvar.1} parent=1 // pred_region
      %195 = vsyncadd %s151, 16
    $region139: #{gru_observation_cell_logvar.1} parent=1 // pred_fallthru
      _
    %s196 = sld [smem:[#allocation5 + $0x3]]
    %s197 = scalar_lea.vmem %s1, %s196
    %s198 = scalar_lea.vmem [#allocation2], 3
    %s199 = scalar_lea.sflag [#allocation3], 3
    %p201 = scmp.lt.u32.totalorder 1, 8
    %p202 = pneg %p201
    // Predicated region
    $region140: #{gru_observation_cell_logvar.1} parent=1 // pred_check
      _
    $region141: #{gru_observation_cell_logvar.1} parent=1 // pred_check_branch
      %204 = sbr.rel (%p201) target = $region143
    $region142: #{gru_observation_cell_logvar.1} parent=1 // pred_region
      %s219 = sand.u32 1, 7
      %p220 = scmp.eq.s32.totalorder %s219, 0
      %p221 = pneg %p220
      // Predicated region
      $region155: #{gru_observation_cell_logvar.1} parent=142 // pred_check
        _
      $region156: #{gru_observation_cell_logvar.1} parent=142 // pred_check_branch
        %223 = sbr.rel (%p220) target = $region158
      $region157: #{gru_observation_cell_logvar.1} parent=142 // pred_region
        %s224 = sand.u32 1, 7
        %s225 = ssub.s32 1, %s224
        %s226 = scalar_lea.vmem %s197, %s225
        %s227 = ssub.s32 1, %s224
        %s228 = scalar_lea.vmem %s198, %s227 [#allocation2]
        %s229 = sshllo.u32 0, %s224
        loop: start=0, step=1, limit=1
        $region159: #{gru_observation_cell_logvar.1} parent=157 // loop_pre_header
          _
        $region160: #{gru_observation_cell_logvar.1} parent=157 // loop_header
          %s231 = sphi 0, %s235
          %p232 = scmp.ge.s32.totalorder %s231, 1
          %s236 = sphi %s226, %s226
          %s237 = sphi %s228, %s228
        $region161: #{gru_observation_cell_logvar.1} parent=157 // loop_header_branch
          %234 = sbr.rel (%p232) target = $region165
        $region162: #{gru_observation_cell_logvar.1} parent=157 // loop_body
          %v238 = vld [vmem:[%s236] sm:%s229]
          %239 = vst [vmem:[%s237] sm:%s229] %v238
        $region163: #{gru_observation_cell_logvar.1} parent=157 // loop_footer
          %s235 = sadd.s32 1, %s231
        $region164: #{gru_observation_cell_logvar.1} parent=157 // loop_footer_branch
          %230 = sbr.rel target = $region160
        $region165: #{gru_observation_cell_logvar.1} parent=157 // loop_exit
          _
      $region158: #{gru_observation_cell_logvar.1} parent=142 // pred_fallthru
        _
    $region143: #{gru_observation_cell_logvar.1} parent=1 // pred_fallthru
      _
    // Predicated region
    $region144: #{gru_observation_cell_logvar.1} parent=1 // pred_check
      %p205 = pneg %p201
    $region145: #{gru_observation_cell_logvar.1} parent=1 // pred_check_branch
      %207 = sbr.rel (%p205) target = $region147
    $region146: #{gru_observation_cell_logvar.1} parent=1 // pred_region
      %s208 = sshllo.u32 0, 1
      loop: start=0, step=1, limit=1
      $region148: #{gru_observation_cell_logvar.1} parent=146 // loop_pre_header
        _
      $region149: #{gru_observation_cell_logvar.1} parent=146 // loop_header
        %s210 = sphi 0, %s214
        %p211 = scmp.ge.s32.totalorder %s210, 1
        %s215 = sphi %s197, %s197
        %s216 = sphi %s198, %s198
      $region150: #{gru_observation_cell_logvar.1} parent=146 // loop_header_branch
        %213 = sbr.rel (%p211) target = $region154
      $region151: #{gru_observation_cell_logvar.1} parent=146 // loop_body
        %v217 = vld [vmem:[%s215] sm:%s208]
        %218 = vst [vmem:[%s216] sm:%s208] %v217
      $region152: #{gru_observation_cell_logvar.1} parent=146 // loop_footer
        %s214 = sadd.s32 1, %s210
      $region153: #{gru_observation_cell_logvar.1} parent=146 // loop_footer_branch
        %209 = sbr.rel target = $region149
      $region154: #{gru_observation_cell_logvar.1} parent=146 // loop_exit
        _
    $region147: #{gru_observation_cell_logvar.1} parent=1 // pred_fallthru
      _
    // Predicated region
    $region166: #{gru_observation_cell_logvar.1} parent=1 // pred_check
      _
    $region167: #{gru_observation_cell_logvar.1} parent=1 // pred_check_branch
      %242 = sbr.rel (0) target = $region169
    $region168: #{gru_observation_cell_logvar.1} parent=1 // pred_region
      %243 = vsyncadd %s199, 16
    $region169: #{gru_observation_cell_logvar.1} parent=1 // pred_fallthru
      _
    %s244 = sld [smem:[#allocation5 + $0x4]]
    %s245 = scalar_lea.vmem %s1, %s244
    %s246 = scalar_lea.vmem [#allocation2], 4
    %s247 = scalar_lea.sflag [#allocation3], 4
    %p249 = scmp.lt.u32.totalorder 1, 8
    %p250 = pneg %p249
    // Predicated region
    $region170: #{gru_observation_cell_logvar.1} parent=1 // pred_check
      _
    $region171: #{gru_observation_cell_logvar.1} parent=1 // pred_check_branch
      %252 = sbr.rel (%p249) target = $region173
    $region172: #{gru_observation_cell_logvar.1} parent=1 // pred_region
      %s267 = sand.u32 1, 7
      %p268 = scmp.eq.s32.totalorder %s267, 0
      %p269 = pneg %p268
      // Predicated region
      $region185: #{gru_observation_cell_logvar.1} parent=172 // pred_check
        _
      $region186: #{gru_observation_cell_logvar.1} parent=172 // pred_check_branch
        %271 = sbr.rel (%p268) target = $region188
      $region187: #{gru_observation_cell_logvar.1} parent=172 // pred_region
        %s272 = sand.u32 1, 7
        %s273 = ssub.s32 1, %s272
        %s274 = scalar_lea.vmem %s245, %s273
        %s275 = ssub.s32 1, %s272
        %s276 = scalar_lea.vmem %s246, %s275 [#allocation2]
        %s277 = sshllo.u32 0, %s272
        loop: start=0, step=1, limit=1
        $region189: #{gru_observation_cell_logvar.1} parent=187 // loop_pre_header
          _
        $region190: #{gru_observation_cell_logvar.1} parent=187 // loop_header
          %s279 = sphi 0, %s283
          %p280 = scmp.ge.s32.totalorder %s279, 1
          %s284 = sphi %s274, %s274
          %s285 = sphi %s276, %s276
        $region191: #{gru_observation_cell_logvar.1} parent=187 // loop_header_branch
          %282 = sbr.rel (%p280) target = $region195
        $region192: #{gru_observation_cell_logvar.1} parent=187 // loop_body
          %v286 = vld [vmem:[%s284] sm:%s277]
          %287 = vst [vmem:[%s285] sm:%s277] %v286
        $region193: #{gru_observation_cell_logvar.1} parent=187 // loop_footer
          %s283 = sadd.s32 1, %s279
        $region194: #{gru_observation_cell_logvar.1} parent=187 // loop_footer_branch
          %278 = sbr.rel target = $region190
        $region195: #{gru_observation_cell_logvar.1} parent=187 // loop_exit
          _
      $region188: #{gru_observation_cell_logvar.1} parent=172 // pred_fallthru
        _
    $region173: #{gru_observation_cell_logvar.1} parent=1 // pred_fallthru
      _
    // Predicated region
    $region174: #{gru_observation_cell_logvar.1} parent=1 // pred_check
      %p253 = pneg %p249
    $region175: #{gru_observation_cell_logvar.1} parent=1 // pred_check_branch
      %255 = sbr.rel (%p253) target = $region177
    $region176: #{gru_observation_cell_logvar.1} parent=1 // pred_region
      %s256 = sshllo.u32 0, 1
      loop: start=0, step=1, limit=1
      $region178: #{gru_observation_cell_logvar.1} parent=176 // loop_pre_header
        _
      $region179: #{gru_observation_cell_logvar.1} parent=176 // loop_header
        %s258 = sphi 0, %s262
        %p259 = scmp.ge.s32.totalorder %s258, 1
        %s263 = sphi %s245, %s245
        %s264 = sphi %s246, %s246
      $region180: #{gru_observation_cell_logvar.1} parent=176 // loop_header_branch
        %261 = sbr.rel (%p259) target = $region184
      $region181: #{gru_observation_cell_logvar.1} parent=176 // loop_body
        %v265 = vld [vmem:[%s263] sm:%s256]
        %266 = vst [vmem:[%s264] sm:%s256] %v265
      $region182: #{gru_observation_cell_logvar.1} parent=176 // loop_footer
        %s262 = sadd.s32 1, %s258
      $region183: #{gru_observation_cell_logvar.1} parent=176 // loop_footer_branch
        %257 = sbr.rel target = $region179
      $region184: #{gru_observation_cell_logvar.1} parent=176 // loop_exit
        _
    $region177: #{gru_observation_cell_logvar.1} parent=1 // pred_fallthru
      _
    // Predicated region
    $region196: #{gru_observation_cell_logvar.1} parent=1 // pred_check
      _
    $region197: #{gru_observation_cell_logvar.1} parent=1 // pred_check_branch
      %290 = sbr.rel (0) target = $region199
    $region198: #{gru_observation_cell_logvar.1} parent=1 // pred_region
      %291 = vsyncadd %s247, 16
    $region199: #{gru_observation_cell_logvar.1} parent=1 // pred_fallthru
      _
    %v292 = vld [vmem:[%s2] sm:$0x1f]
    %v293 = vld [vmem:[%s3] sm:$0x1f]
    %v294 = vld [vmem:[%s5] sm:$0x1f]
    %v295 = vsub.f32 %v292, %v294
    %v296 = vmul.f32 %v294, -0.5
    %v297 = vmul.f32 %v296, 1.442695
    %v298 = vpow.pop %v297
    %300 = vrot.lane.b32.xlu0 %v298, 124
    %v301 = vpop.permute.xlu0 %300
    %v303 = vmul.f32 %v295, %v301
    %v304 = vmul.f32 %v303, %v303
    %306 = vrot.lane.b32.xlu0 %v294, 124
    %v307 = vpop.permute.xlu0 %306
    %v309 = vadd.f32 %v304, %v307
    %v310 = vadd.f32 %v309, 1.837877
    %v311 = vmul.f32 %v310, %v293
    %v312 = vmul.f32 %v311, 0.5
    %vm313 = vcmask 28672
    %314 = vst.msk [vmem:[%s13] sm:$0x1f] %vm313, %v312
    %315 = vrot.lane.b32.xlu0 %v294, 4
    %v316 = vpop.permute.xlu0 %315
    %319 = vrot.lane.b32.xlu0 %v303, 12
    %v320 = vpop.permute.xlu0 %319
    %vm322 = vcmask 31744
    %v323 = vsel %vm322, %v292, %v316
    %vm324 = vcmask 64512
    %v325 = vsel %vm324, %v323, %v316
    %vm326 = vcmask 97280
    %v327 = vsel %vm326, %v325, %v320
    %v328 = vld [vmem:[%s6] sm:$0xff]
    %v329 = vld [vmem:[%s6 + $0x8] sm:$0xff]
    %v330 = vld [vmem:[%s7] sm:$0x1]
    %v332 = vlaneseq
    %v333 = vshrl.u32 %v332, 7
    %v334 = vsub.s32 0, %v333
    %v335 = vrot.slane %v330, %v334
    %vm337 = vcmask 130048
    %v339 = vsel %vm337, %v327, 0
    %341 = vmatprep.subr.mxu0 0.0
    %342 = vmatpush1.msra.mxu0 %v328
    %343 = vmatprep.subr.mxu0 0.0
    %344 = vmatpush1.msra.mxu0 %v329
    %345 = vmatprep.subr.mxu0 0.0
    %346 = vmatpush1.msra.mxu0 0.0
    %347 = vmatprep.subr.mxu0 0.0
    %348 = vmatpush1.msra.mxu0 0.0
    %349 = vmatprep.subr.mxu0 0.0
    %350 = vmatpush1.msra.mxu0 0.0
    %351 = vmatprep.subr.mxu0 0.0
    %352 = vmatpush1.msra.mxu0 0.0
    %353 = vmatprep.subr.mxu0 0.0
    %354 = vmatpush1.msra.mxu0 0.0
    %355 = vmatprep.subr.mxu0 0.0
    %356 = vmatpush1.msra.mxu0 0.0
    %357 = vmatprep.subr.mxu0 0.0
    %358 = vmatpush1.msra.mxu0 0.0
    %359 = vmatprep.subr.mxu0 0.0
    %360 = vmatpush1.msra.mxu0 0.0
    %361 = vmatprep.subr.mxu0 0.0
    %362 = vmatpush1.msra.mxu0 0.0
    %363 = vmatprep.subr.mxu0 0.0
    %364 = vmatpush1.msra.mxu0 0.0
    %365 = vmatprep.subr.mxu0 0.0
    %366 = vmatpush1.msra.mxu0 0.0
    %367 = vmatprep.subr.mxu0 0.0
    %368 = vmatpush1.msra.mxu0 0.0
    %369 = vmatprep.subr.mxu0 0.0
    %370 = vmatpush1.msra.mxu0 0.0
    %371 = vmatprep.subr.mxu0 0.0
    %372 = vmatpush1.msra.mxu0 0.0
    %373 = vmatprep.subr.mxu0 0.0
    %374 = vmatpush1.msra.mxu0 0.0
    %375 = vmatprep.subr.mxu0 0.0
    %376 = vmatpush1.msra.mxu0 0.0
    %377 = vmatprep.subr.mxu0 0.0
    %378 = vmatpush1.msra.mxu0 0.0
    %379 = vmatprep.subr.mxu0 0.0
    %380 = vmatpush1.msra.mxu0 0.0
    %381 = vmatprep.subr.mxu0 0.0
    %382 = vmatpush1.msra.mxu0 0.0
    %383 = vmatprep.subr.mxu0 0.0
    %384 = vmatpush1.msra.mxu0 0.0
    %385 = vmatprep.subr.mxu0 0.0
    %386 = vmatpush1.msra.mxu0 0.0
    %387 = vmatprep.subr.mxu0 0.0
    %388 = vmatpush1.msra.mxu0 0.0
    %389 = vmatprep.subr.mxu0 0.0
    %390 = vmatpush1.msra.mxu0 0.0
    %391 = vmatprep.subr.mxu0 0.0
    %392 = vmatpush1.msra.mxu0 0.0
    %393 = vmatprep.subr.mxu0 0.0
    %394 = vmatpush1.msra.mxu0 0.0
    %395 = vmatprep.subr.mxu0 0.0
    %396 = vmatpush1.msra.mxu0 0.0
    %397 = vmatprep.subr.mxu0 0.0
    %398 = vmatpush1.msra.mxu0 0.0
    %399 = vmatprep.subr.mxu0 0.0
    %400 = vmatpush1.msra.mxu0 0.0
    %401 = vmatprep.subr.mxu0 0.0
    %402 = vmatpush1.msra.mxu0 0.0
    %403 = vmatprep.subr.mxu0 0.0
    %404 = vmatpush1.msra.mxu0 0.0
    %405 = vmatprep.mubr.f32.mxu0 0.0
    %406 = vmatmul.mubr.f32.gmra.mrb[0].mxu0 %v339
    %v407 = vpop.f32.mrb[0].mxu0
    %v408 = vadd.f32 %v335, %v407
    %v409 = vpop.f32.mrb[0].mxu0
    %410 = vdwg.mxu0
    %v411 = vmax.f32 %v408, 0.0
    %v412 = vld [vmem:[%s4] sm:$0x1f]
    %v413 = vmul.f32 %v411, %v412
    %v414 = vld [vmem:[%s8] sm:$0xff]
    %v415 = vld [vmem:[%s8 + $0x8] sm:$0xff]
    %v416 = vld [vmem:[%s10] sm:$0x1]
    %v418 = vlaneseq
    %v419 = vshrl.u32 %v418, 7
    %v420 = vsub.s32 0, %v419
    %v421 = vrot.slane %v416, %v420
    %v424 = vsel %vm337, %v413, 0
    %426 = vmatprep.subr.mxu0 0.0
    %427 = vmatpush1.msra.mxu0 %v414
    %428 = vmatprep.subr.mxu0 0.0
    %429 = vmatpush1.msra.mxu0 %v415
    %430 = vmatprep.subr.mxu0 0.0
    %431 = vmatpush1.msra.mxu0 0.0
    %432 = vmatprep.subr.mxu0 0.0
    %433 = vmatpush1.msra.mxu0 0.0
    %434 = vmatprep.subr.mxu0 0.0
    %435 = vmatpush1.msra.mxu0 0.0
    %436 = vmatprep.subr.mxu0 0.0
    %437 = vmatpush1.msra.mxu0 0.0
    %438 = vmatprep.subr.mxu0 0.0
    %439 = vmatpush1.msra.mxu0 0.0
    %440 = vmatprep.subr.mxu0 0.0
    %441 = vmatpush1.msra.mxu0 0.0
    %442 = vmatprep.subr.mxu0 0.0
    %443 = vmatpush1.msra.mxu0 0.0
    %444 = vmatprep.subr.mxu0 0.0
    %445 = vmatpush1.msra.mxu0 0.0
    %446 = vmatprep.subr.mxu0 0.0
    %447 = vmatpush1.msra.mxu0 0.0
    %448 = vmatprep.subr.mxu0 0.0
    %449 = vmatpush1.msra.mxu0 0.0
    %450 = vmatprep.subr.mxu0 0.0
    %451 = vmatpush1.msra.mxu0 0.0
    %452 = vmatprep.subr.mxu0 0.0
    %453 = vmatpush1.msra.mxu0 0.0
    %454 = vmatprep.subr.mxu0 0.0
    %455 = vmatpush1.msra.mxu0 0.0
    %456 = vmatprep.subr.mxu0 0.0
    %457 = vmatpush1.msra.mxu0 0.0
    %458 = vmatprep.subr.mxu0 0.0
    %459 = vmatpush1.msra.mxu0 0.0
    %460 = vmatprep.subr.mxu0 0.0
    %461 = vmatpush1.msra.mxu0 0.0
    %462 = vmatprep.subr.mxu0 0.0
    %463 = vmatpush1.msra.mxu0 0.0
    %464 = vmatprep.subr.mxu0 0.0
    %465 = vmatpush1.msra.mxu0 0.0
    %466 = vmatprep.subr.mxu0 0.0
    %467 = vmatpush1.msra.mxu0 0.0
    %468 = vmatprep.subr.mxu0 0.0
    %469 = vmatpush1.msra.mxu0 0.0
    %470 = vmatprep.subr.mxu0 0.0
    %471 = vmatpush1.msra.mxu0 0.0
    %472 = vmatprep.subr.mxu0 0.0
    %473 = vmatpush1.msra.mxu0 0.0
    %474 = vmatprep.subr.mxu0 0.0
    %475 = vmatpush1.msra.mxu0 0.0
    %476 = vmatprep.subr.mxu0 0.0
    %477 = vmatpush1.msra.mxu0 0.0
    %478 = vmatprep.subr.mxu0 0.0
    %479 = vmatpush1.msra.mxu0 0.0
    %480 = vmatprep.subr.mxu0 0.0
    %481 = vmatpush1.msra.mxu0 0.0
    %482 = vmatprep.subr.mxu0 0.0
    %483 = vmatpush1.msra.mxu0 0.0
    %484 = vmatprep.subr.mxu0 0.0
    %485 = vmatpush1.msra.mxu0 0.0
    %486 = vmatprep.subr.mxu0 0.0
    %487 = vmatpush1.msra.mxu0 0.0
    %488 = vmatprep.subr.mxu0 0.0
    %489 = vmatpush1.msra.mxu0 0.0
    %490 = vmatprep.mubr.f32.mxu0 0.0
    %491 = vmatmul.mubr.f32.gmra.mrb[0].mxu0 %v424
    %v492 = vpop.f32.mrb[0].mxu0
    %v493 = vadd.f32 %v421, %v492
    %v494 = vpop.f32.mrb[0].mxu0
    %495 = vdwg.mxu0
    %s496 = sld [smem:[#allocation5]]
    %s497 = smul.u32 1, 1
    %s498 = sshll.u32 %s497, 4
    %499 = dma.done [#allocation3], %s498
    %s500 = sld [smem:[#allocation5 + $0x1]]
    %s501 = sshll.u32 %s497, 4
    %502 = dma.done %s103, %s501
    %s503 = sld [smem:[#allocation5 + $0x2]]
    %s504 = sshll.u32 %s497, 4
    %505 = dma.done %s151, %s504
    %s506 = sld [smem:[#allocation5 + $0x3]]
    %s507 = sshll.u32 %s497, 4
    %508 = dma.done %s199, %s507
    %s509 = sld [smem:[#allocation5 + $0x4]]
    %s510 = sshll.u32 %s497, 4
    %511 = dma.done %s247, %s510
    %v512 = vld [vmem:[#allocation2] sm:$0x1f]
    %v513 = vld [vmem:[%s9] sm:$0xff]
    %v514 = vld [vmem:[%s9 + $0x8] sm:$0xff]
    %v515 = vld [vmem:[%s9 + $0x10] sm:$0xff]
    %v516 = vld [vmem:[%s9 + $0x18] sm:$0xff]
    %v517 = vld [vmem:[%s11] sm:$0x1]
    %v519 = vlaneseq
    %v520 = vshrl.u32 %v519, 7
    %v521 = vsub.s32 0, %v520
    %v522 = vrot.slane %v517, %v521
    %vm524 = vcmask 261120
    %v526 = vsel %vm524, %v512, 0
    %528 = vmatprep.subr.mxu0 0.0
    %529 = vmatpush1.msra.mxu0 %v513
    %530 = vmatprep.subr.mxu0 0.0
    %531 = vmatpush1.msra.mxu0 %v514
    %532 = vmatprep.subr.mxu0 0.0
    %533 = vmatpush1.msra.mxu0 %v515
    %534 = vmatprep.subr.mxu0 0.0
    %535 = vmatpush1.msra.mxu0 %v516
    %536 = vmatprep.subr.mxu0 0.0
    %537 = vmatpush1.msra.mxu0 0.0
    %538 = vmatprep.subr.mxu0 0.0
    %539 = vmatpush1.msra.mxu0 0.0
    %540 = vmatprep.subr.mxu0 0.0
    %541 = vmatpush1.msra.mxu0 0.0
    %542 = vmatprep.subr.mxu0 0.0
    %543 = vmatpush1.msra.mxu0 0.0
    %544 = vmatprep.subr.mxu0 0.0
    %545 = vmatpush1.msra.mxu0 0.0
    %546 = vmatprep.subr.mxu0 0.0
    %547 = vmatpush1.msra.mxu0 0.0
    %548 = vmatprep.subr.mxu0 0.0
    %549 = vmatpush1.msra.mxu0 0.0
    %550 = vmatprep.subr.mxu0 0.0
    %551 = vmatpush1.msra.mxu0 0.0
    %552 = vmatprep.subr.mxu0 0.0
    %553 = vmatpush1.msra.mxu0 0.0
    %554 = vmatprep.subr.mxu0 0.0
    %555 = vmatpush1.msra.mxu0 0.0
    %556 = vmatprep.subr.mxu0 0.0
    %557 = vmatpush1.msra.mxu0 0.0
    %558 = vmatprep.subr.mxu0 0.0
    %559 = vmatpush1.msra.mxu0 0.0
    %560 = vmatprep.subr.mxu0 0.0
    %561 = vmatpush1.msra.mxu0 0.0
    %562 = vmatprep.subr.mxu0 0.0
    %563 = vmatpush1.msra.mxu0 0.0
    %564 = vmatprep.subr.mxu0 0.0
    %565 = vmatpush1.msra.mxu0 0.0
    %566 = vmatprep.subr.mxu0 0.0
    %567 = vmatpush1.msra.mxu0 0.0
    %568 = vmatprep.subr.mxu0 0.0
    %569 = vmatpush1.msra.mxu0 0.0
    %570 = vmatprep.subr.mxu0 0.0
    %571 = vmatpush1.msra.mxu0 0.0
    %572 = vmatprep.subr.mxu0 0.0
    %573 = vmatpush1.msra.mxu0 0.0
    %574 = vmatprep.subr.mxu0 0.0
    %575 = vmatpush1.msra.mxu0 0.0
    %576 = vmatprep.subr.mxu0 0.0
    %577 = vmatpush1.msra.mxu0 0.0
    %578 = vmatprep.subr.mxu0 0.0
    %579 = vmatpush1.msra.mxu0 0.0
    %580 = vmatprep.subr.mxu0 0.0
    %581 = vmatpush1.msra.mxu0 0.0
    %582 = vmatprep.subr.mxu0 0.0
    %583 = vmatpush1.msra.mxu0 0.0
    %584 = vmatprep.subr.mxu0 0.0
    %585 = vmatpush1.msra.mxu0 0.0
    %586 = vmatprep.subr.mxu0 0.0
    %587 = vmatpush1.msra.mxu0 0.0
    %588 = vmatprep.subr.mxu0 0.0
    %589 = vmatpush1.msra.mxu0 0.0
    %590 = vmatprep.subr.mxu0 0.0
    %591 = vmatpush1.msra.mxu0 0.0
    %592 = vmatprep.mubr.f32.mxu0 0.0
    %593 = vmatmul.mubr.f32.gmra.mrb[0].mxu0 %v526
    %v594 = vpop.f32.mrb[0].mxu0
    %v595 = vadd.f32 %v522, %v594
    %v596 = vpop.f32.mrb[0].mxu0
    %597 = vdwg.mxu0
    %v598 = vadd.f32 %v493, %v595
    %v599 = vxor.u32 %v598, 2147483648
    %v600 = vmul.f32 %v599, 1.442695
    %v601 = vpow.pop %v600
    %v602 = vadd.f32 %v601, 1.0
    %v603 = vrcp.pop %v602
    %v604 = vmul.f32 1.0, %v603
    %606 = vrot.lane.b32.xlu0 %v595, 64
    %v607 = vpop.permute.xlu0 %606
    %v609 = vmul.f32 %v604, %v607
    %611 = vrot.lane.b32.xlu0 %v609, 64
    %v612 = vpop.permute.xlu0 %611
    %v614 = vadd.f32 %v493, %v612
    %v615 = vtanh.pop %v614
    %v616 = vsub.f32 1.0, %v604
    %618 = vrot.lane.b32.xlu0 %v615, 96
    %v619 = vpop.permute.xlu0 %618
    %v621 = vmul.f32 %v616, %v619
    %622 = vrot.lane.b32.xlu0 %v512, 32
    %v623 = vpop.permute.xlu0 %622
    %v625 = vmul.f32 %v604, %v623
    %v626 = vadd.f32 %v621, %v625
    %628 = vrot.lane.b32.xlu0 %v626, 96
    %v629 = vpop.permute.xlu0 %628
    %vm631 = vcmask 258048
    %632 = vst.msk [vmem:[#allocation2] sm:$0x1f] %vm631, %v629
    %s633 = sld [smem:[#allocation5]]
    %s634 = scalar_lea.vmem %s12, %s633
    %p636 = scmp.lt.u32.totalorder 1, 8
    %p637 = pneg %p636
    // Predicated region
    $region200: #{gru_observation_cell_logvar.1} parent=1 // pred_check
      _
    $region201: #{gru_observation_cell_logvar.1} parent=1 // pred_check_branch
      %639 = sbr.rel (%p636) target = $region203
    $region202: #{gru_observation_cell_logvar.1} parent=1 // pred_region
      %s654 = sand.u32 1, 7
      %p655 = scmp.eq.s32.totalorder %s654, 0
      %p656 = pneg %p655
      // Predicated region
      $region215: #{gru_observation_cell_logvar.1} parent=202 // pred_check
        _
      $region216: #{gru_observation_cell_logvar.1} parent=202 // pred_check_branch
        %658 = sbr.rel (%p655) target = $region218
      $region217: #{gru_observation_cell_logvar.1} parent=202 // pred_region
        %s659 = sand.u32 1, 7
        %s660 = ssub.s32 1, %s659
        %s661 = scalar_lea.vmem [#allocation2], %s660
        %s662 = ssub.s32 1, %s659
        %s663 = scalar_lea.vmem %s634, %s662
        %s664 = sshllo.u32 0, %s659
        loop: start=0, step=1, limit=1
        $region219: #{gru_observation_cell_logvar.1} parent=217 // loop_pre_header
          _
        $region220: #{gru_observation_cell_logvar.1} parent=217 // loop_header
          %s666 = sphi 0, %s670
          %p667 = scmp.ge.s32.totalorder %s666, 1
          %s671 = sphi %s661, %s661
          %s672 = sphi %s663, %s663
        $region221: #{gru_observation_cell_logvar.1} parent=217 // loop_header_branch
          %669 = sbr.rel (%p667) target = $region225
        $region222: #{gru_observation_cell_logvar.1} parent=217 // loop_body
          %v673 = vld [vmem:[%s671] sm:%s664]
          %674 = vst [vmem:[%s672] sm:%s664] %v673
        $region223: #{gru_observation_cell_logvar.1} parent=217 // loop_footer
          %s670 = sadd.s32 1, %s666
        $region224: #{gru_observation_cell_logvar.1} parent=217 // loop_footer_branch
          %665 = sbr.rel target = $region220
        $region225: #{gru_observation_cell_logvar.1} parent=217 // loop_exit
          _
      $region218: #{gru_observation_cell_logvar.1} parent=202 // pred_fallthru
        _
    $region203: #{gru_observation_cell_logvar.1} parent=1 // pred_fallthru
      _
    // Predicated region
    $region204: #{gru_observation_cell_logvar.1} parent=1 // pred_check
      %p640 = pneg %p636
    $region205: #{gru_observation_cell_logvar.1} parent=1 // pred_check_branch
      %642 = sbr.rel (%p640) target = $region207
    $region206: #{gru_observation_cell_logvar.1} parent=1 // pred_region
      %s643 = sshllo.u32 0, 1
      loop: start=0, step=1, limit=1
      $region208: #{gru_observation_cell_logvar.1} parent=206 // loop_pre_header
        _
      $region209: #{gru_observation_cell_logvar.1} parent=206 // loop_header
        %s645 = sphi 0, %s649
        %p646 = scmp.ge.s32.totalorder %s645, 1
        %s650 = sphi [#allocation2], [#allocation2]
        %s651 = sphi %s634, %s634
      $region210: #{gru_observation_cell_logvar.1} parent=206 // loop_header_branch
        %648 = sbr.rel (%p646) target = $region214
      $region211: #{gru_observation_cell_logvar.1} parent=206 // loop_body
        %v652 = vld [vmem:[%s650] sm:%s643]
        %653 = vst [vmem:[%s651] sm:%s643] %v652
      $region212: #{gru_observation_cell_logvar.1} parent=206 // loop_footer
        %s649 = sadd.s32 1, %s645
      $region213: #{gru_observation_cell_logvar.1} parent=206 // loop_footer_branch
        %644 = sbr.rel target = $region209
      $region214: #{gru_observation_cell_logvar.1} parent=206 // loop_exit
        _
    $region207: #{gru_observation_cell_logvar.1} parent=1 // pred_fallthru
      _
    // Predicated region
    $region226: #{gru_observation_cell_logvar.1} parent=1 // pred_check
      _
    $region227: #{gru_observation_cell_logvar.1} parent=1 // pred_check_branch
      %677 = sbr.rel (0) target = $region229
    $region228: #{gru_observation_cell_logvar.1} parent=1 // pred_region
      %678 = vsyncadd [#allocation4], 16
    $region229: #{gru_observation_cell_logvar.1} parent=1 // pred_fallthru
      _
    %s679 = sld [smem:[#allocation5 + $0x1]]
    %s680 = scalar_lea.vmem %s12, %s679
    %s681 = scalar_lea.sflag [#allocation4], 1
    %p683 = scmp.lt.u32.totalorder 1, 8
    %p684 = pneg %p683
    // Predicated region
    $region230: #{gru_observation_cell_logvar.1} parent=1 // pred_check
      _
    $region231: #{gru_observation_cell_logvar.1} parent=1 // pred_check_branch
      %686 = sbr.rel (%p683) target = $region233
    $region232: #{gru_observation_cell_logvar.1} parent=1 // pred_region
      %s701 = sand.u32 1, 7
      %p702 = scmp.eq.s32.totalorder %s701, 0
      %p703 = pneg %p702
      // Predicated region
      $region245: #{gru_observation_cell_logvar.1} parent=232 // pred_check
        _
      $region246: #{gru_observation_cell_logvar.1} parent=232 // pred_check_branch
        %705 = sbr.rel (%p702) target = $region248
      $region247: #{gru_observation_cell_logvar.1} parent=232 // pred_region
        %s706 = sand.u32 1, 7
        %s707 = ssub.s32 1, %s706
        %s708 = scalar_lea.vmem %s102, %s707 [#allocation2]
        %s709 = ssub.s32 1, %s706
        %s710 = scalar_lea.vmem %s680, %s709
        %s711 = sshllo.u32 0, %s706
        loop: start=0, step=1, limit=1
        $region249: #{gru_observation_cell_logvar.1} parent=247 // loop_pre_header
          _
        $region250: #{gru_observation_cell_logvar.1} parent=247 // loop_header
          %s713 = sphi 0, %s717
          %p714 = scmp.ge.s32.totalorder %s713, 1
          %s718 = sphi %s708, %s708
          %s719 = sphi %s710, %s710
        $region251: #{gru_observation_cell_logvar.1} parent=247 // loop_header_branch
          %716 = sbr.rel (%p714) target = $region255
        $region252: #{gru_observation_cell_logvar.1} parent=247 // loop_body
          %v720 = vld [vmem:[%s718] sm:%s711]
          %721 = vst [vmem:[%s719] sm:%s711] %v720
        $region253: #{gru_observation_cell_logvar.1} parent=247 // loop_footer
          %s717 = sadd.s32 1, %s713
        $region254: #{gru_observation_cell_logvar.1} parent=247 // loop_footer_branch
          %712 = sbr.rel target = $region250
        $region255: #{gru_observation_cell_logvar.1} parent=247 // loop_exit
          _
      $region248: #{gru_observation_cell_logvar.1} parent=232 // pred_fallthru
        _
    $region233: #{gru_observation_cell_logvar.1} parent=1 // pred_fallthru
      _
    // Predicated region
    $region234: #{gru_observation_cell_logvar.1} parent=1 // pred_check
      %p687 = pneg %p683
    $region235: #{gru_observation_cell_logvar.1} parent=1 // pred_check_branch
      %689 = sbr.rel (%p687) target = $region237
    $region236: #{gru_observation_cell_logvar.1} parent=1 // pred_region
      %s690 = sshllo.u32 0, 1
      loop: start=0, step=1, limit=1
      $region238: #{gru_observation_cell_logvar.1} parent=236 // loop_pre_header
        _
      $region239: #{gru_observation_cell_logvar.1} parent=236 // loop_header
        %s692 = sphi 0, %s696
        %p693 = scmp.ge.s32.totalorder %s692, 1
        %s697 = sphi %s102, %s102
        %s698 = sphi %s680, %s680
      $region240: #{gru_observation_cell_logvar.1} parent=236 // loop_header_branch
        %695 = sbr.rel (%p693) target = $region244
      $region241: #{gru_observation_cell_logvar.1} parent=236 // loop_body
        %v699 = vld [vmem:[%s697] sm:%s690]
        %700 = vst [vmem:[%s698] sm:%s690] %v699
      $region242: #{gru_observation_cell_logvar.1} parent=236 // loop_footer
        %s696 = sadd.s32 1, %s692
      $region243: #{gru_observation_cell_logvar.1} parent=236 // loop_footer_branch
        %691 = sbr.rel target = $region239
      $region244: #{gru_observation_cell_logvar.1} parent=236 // loop_exit
        _
    $region237: #{gru_observation_cell_logvar.1} parent=1 // pred_fallthru
      _
    // Predicated region
    $region256: #{gru_observation_cell_logvar.1} parent=1 // pred_check
      _
    $region257: #{gru_observation_cell_logvar.1} parent=1 // pred_check_branch
      %724 = sbr.rel (0) target = $region259
    $region258: #{gru_observation_cell_logvar.1} parent=1 // pred_region
      %725 = vsyncadd %s681, 16
    $region259: #{gru_observation_cell_logvar.1} parent=1 // pred_fallthru
      _
    %s726 = sld [smem:[#allocation5 + $0x2]]
    %s727 = scalar_lea.vmem %s12, %s726
    %s728 = scalar_lea.sflag [#allocation4], 2
    %p730 = scmp.lt.u32.totalorder 1, 8
    %p731 = pneg %p730
    // Predicated region
    $region260: #{gru_observation_cell_logvar.1} parent=1 // pred_check
      _
    $region261: #{gru_observation_cell_logvar.1} parent=1 // pred_check_branch
      %733 = sbr.rel (%p730) target = $region263
    $region262: #{gru_observation_cell_logvar.1} parent=1 // pred_region
      %s748 = sand.u32 1, 7
      %p749 = scmp.eq.s32.totalorder %s748, 0
      %p750 = pneg %p749
      // Predicated region
      $region275: #{gru_observation_cell_logvar.1} parent=262 // pred_check
        _
      $region276: #{gru_observation_cell_logvar.1} parent=262 // pred_check_branch
        %752 = sbr.rel (%p749) target = $region278
      $region277: #{gru_observation_cell_logvar.1} parent=262 // pred_region
        %s753 = sand.u32 1, 7
        %s754 = ssub.s32 1, %s753
        %s755 = scalar_lea.vmem %s150, %s754 [#allocation2]
        %s756 = ssub.s32 1, %s753
        %s757 = scalar_lea.vmem %s727, %s756
        %s758 = sshllo.u32 0, %s753
        loop: start=0, step=1, limit=1
        $region279: #{gru_observation_cell_logvar.1} parent=277 // loop_pre_header
          _
        $region280: #{gru_observation_cell_logvar.1} parent=277 // loop_header
          %s760 = sphi 0, %s764
          %p761 = scmp.ge.s32.totalorder %s760, 1
          %s765 = sphi %s755, %s755
          %s766 = sphi %s757, %s757
        $region281: #{gru_observation_cell_logvar.1} parent=277 // loop_header_branch
          %763 = sbr.rel (%p761) target = $region285
        $region282: #{gru_observation_cell_logvar.1} parent=277 // loop_body
          %v767 = vld [vmem:[%s765] sm:%s758]
          %768 = vst [vmem:[%s766] sm:%s758] %v767
        $region283: #{gru_observation_cell_logvar.1} parent=277 // loop_footer
          %s764 = sadd.s32 1, %s760
        $region284: #{gru_observation_cell_logvar.1} parent=277 // loop_footer_branch
          %759 = sbr.rel target = $region280
        $region285: #{gru_observation_cell_logvar.1} parent=277 // loop_exit
          _
      $region278: #{gru_observation_cell_logvar.1} parent=262 // pred_fallthru
        _
    $region263: #{gru_observation_cell_logvar.1} parent=1 // pred_fallthru
      _
    // Predicated region
    $region264: #{gru_observation_cell_logvar.1} parent=1 // pred_check
      %p734 = pneg %p730
    $region265: #{gru_observation_cell_logvar.1} parent=1 // pred_check_branch
      %736 = sbr.rel (%p734) target = $region267
    $region266: #{gru_observation_cell_logvar.1} parent=1 // pred_region
      %s737 = sshllo.u32 0, 1
      loop: start=0, step=1, limit=1
      $region268: #{gru_observation_cell_logvar.1} parent=266 // loop_pre_header
        _
      $region269: #{gru_observation_cell_logvar.1} parent=266 // loop_header
        %s739 = sphi 0, %s743
        %p740 = scmp.ge.s32.totalorder %s739, 1
        %s744 = sphi %s150, %s150
        %s745 = sphi %s727, %s727
      $region270: #{gru_observation_cell_logvar.1} parent=266 // loop_header_branch
        %742 = sbr.rel (%p740) target = $region274
      $region271: #{gru_observation_cell_logvar.1} parent=266 // loop_body
        %v746 = vld [vmem:[%s744] sm:%s737]
        %747 = vst [vmem:[%s745] sm:%s737] %v746
      $region272: #{gru_observation_cell_logvar.1} parent=266 // loop_footer
        %s743 = sadd.s32 1, %s739
      $region273: #{gru_observation_cell_logvar.1} parent=266 // loop_footer_branch
        %738 = sbr.rel target = $region269
      $region274: #{gru_observation_cell_logvar.1} parent=266 // loop_exit
        _
    $region267: #{gru_observation_cell_logvar.1} parent=1 // pred_fallthru
      _
    // Predicated region
    $region286: #{gru_observation_cell_logvar.1} parent=1 // pred_check
      _
    $region287: #{gru_observation_cell_logvar.1} parent=1 // pred_check_branch
      %771 = sbr.rel (0) target = $region289
    $region288: #{gru_observation_cell_logvar.1} parent=1 // pred_region
      %772 = vsyncadd %s728, 16
    $region289: #{gru_observation_cell_logvar.1} parent=1 // pred_fallthru
      _
    %s773 = sld [smem:[#allocation5 + $0x3]]
    %s774 = scalar_lea.vmem %s12, %s773
    %s775 = scalar_lea.sflag [#allocation4], 3
    %p777 = scmp.lt.u32.totalorder 1, 8
    %p778 = pneg %p777
    // Predicated region
    $region290: #{gru_observation_cell_logvar.1} parent=1 // pred_check
      _
    $region291: #{gru_observation_cell_logvar.1} parent=1 // pred_check_branch
      %780 = sbr.rel (%p777) target = $region293
    $region292: #{gru_observation_cell_logvar.1} parent=1 // pred_region
      %s795 = sand.u32 1, 7
      %p796 = scmp.eq.s32.totalorder %s795, 0
      %p797 = pneg %p796
      // Predicated region
      $region305: #{gru_observation_cell_logvar.1} parent=292 // pred_check
        _
      $region306: #{gru_observation_cell_logvar.1} parent=292 // pred_check_branch
        %799 = sbr.rel (%p796) target = $region308
      $region307: #{gru_observation_cell_logvar.1} parent=292 // pred_region
        %s800 = sand.u32 1, 7
        %s801 = ssub.s32 1, %s800
        %s802 = scalar_lea.vmem %s198, %s801 [#allocation2]
        %s803 = ssub.s32 1, %s800
        %s804 = scalar_lea.vmem %s774, %s803
        %s805 = sshllo.u32 0, %s800
        loop: start=0, step=1, limit=1
        $region309: #{gru_observation_cell_logvar.1} parent=307 // loop_pre_header
          _
        $region310: #{gru_observation_cell_logvar.1} parent=307 // loop_header
          %s807 = sphi 0, %s811
          %p808 = scmp.ge.s32.totalorder %s807, 1
          %s812 = sphi %s802, %s802
          %s813 = sphi %s804, %s804
        $region311: #{gru_observation_cell_logvar.1} parent=307 // loop_header_branch
          %810 = sbr.rel (%p808) target = $region315
        $region312: #{gru_observation_cell_logvar.1} parent=307 // loop_body
          %v814 = vld [vmem:[%s812] sm:%s805]
          %815 = vst [vmem:[%s813] sm:%s805] %v814
        $region313: #{gru_observation_cell_logvar.1} parent=307 // loop_footer
          %s811 = sadd.s32 1, %s807
        $region314: #{gru_observation_cell_logvar.1} parent=307 // loop_footer_branch
          %806 = sbr.rel target = $region310
        $region315: #{gru_observation_cell_logvar.1} parent=307 // loop_exit
          _
      $region308: #{gru_observation_cell_logvar.1} parent=292 // pred_fallthru
        _
    $region293: #{gru_observation_cell_logvar.1} parent=1 // pred_fallthru
      _
    // Predicated region
    $region294: #{gru_observation_cell_logvar.1} parent=1 // pred_check
      %p781 = pneg %p777
    $region295: #{gru_observation_cell_logvar.1} parent=1 // pred_check_branch
      %783 = sbr.rel (%p781) target = $region297
    $region296: #{gru_observation_cell_logvar.1} parent=1 // pred_region
      %s784 = sshllo.u32 0, 1
      loop: start=0, step=1, limit=1
      $region298: #{gru_observation_cell_logvar.1} parent=296 // loop_pre_header
        _
      $region299: #{gru_observation_cell_logvar.1} parent=296 // loop_header
        %s786 = sphi 0, %s790
        %p787 = scmp.ge.s32.totalorder %s786, 1
        %s791 = sphi %s198, %s198
        %s792 = sphi %s774, %s774
      $region300: #{gru_observation_cell_logvar.1} parent=296 // loop_header_branch
        %789 = sbr.rel (%p787) target = $region304
      $region301: #{gru_observation_cell_logvar.1} parent=296 // loop_body
        %v793 = vld [vmem:[%s791] sm:%s784]
        %794 = vst [vmem:[%s792] sm:%s784] %v793
      $region302: #{gru_observation_cell_logvar.1} parent=296 // loop_footer
        %s790 = sadd.s32 1, %s786
      $region303: #{gru_observation_cell_logvar.1} parent=296 // loop_footer_branch
        %785 = sbr.rel target = $region299
      $region304: #{gru_observation_cell_logvar.1} parent=296 // loop_exit
        _
    $region297: #{gru_observation_cell_logvar.1} parent=1 // pred_fallthru
      _
    // Predicated region
    $region316: #{gru_observation_cell_logvar.1} parent=1 // pred_check
      _
    $region317: #{gru_observation_cell_logvar.1} parent=1 // pred_check_branch
      %818 = sbr.rel (0) target = $region319
    $region318: #{gru_observation_cell_logvar.1} parent=1 // pred_region
      %819 = vsyncadd %s775, 16
    $region319: #{gru_observation_cell_logvar.1} parent=1 // pred_fallthru
      _
    %s820 = sld [smem:[#allocation5 + $0x4]]
    %s821 = scalar_lea.vmem %s12, %s820
    %s822 = scalar_lea.sflag [#allocation4], 4
    %p824 = scmp.lt.u32.totalorder 1, 8
    %p825 = pneg %p824
    // Predicated region
    $region320: #{gru_observation_cell_logvar.1} parent=1 // pred_check
      _
    $region321: #{gru_observation_cell_logvar.1} parent=1 // pred_check_branch
      %827 = sbr.rel (%p824) target = $region323
    $region322: #{gru_observation_cell_logvar.1} parent=1 // pred_region
      %s842 = sand.u32 1, 7
      %p843 = scmp.eq.s32.totalorder %s842, 0
      %p844 = pneg %p843
      // Predicated region
      $region335: #{gru_observation_cell_logvar.1} parent=322 // pred_check
        _
      $region336: #{gru_observation_cell_logvar.1} parent=322 // pred_check_branch
        %846 = sbr.rel (%p843) target = $region338
      $region337: #{gru_observation_cell_logvar.1} parent=322 // pred_region
        %s847 = sand.u32 1, 7
        %s848 = ssub.s32 1, %s847
        %s849 = scalar_lea.vmem %s246, %s848 [#allocation2]
        %s850 = ssub.s32 1, %s847
        %s851 = scalar_lea.vmem %s821, %s850
        %s852 = sshllo.u32 0, %s847
        loop: start=0, step=1, limit=1
        $region339: #{gru_observation_cell_logvar.1} parent=337 // loop_pre_header
          _
        $region340: #{gru_observation_cell_logvar.1} parent=337 // loop_header
          %s854 = sphi 0, %s858
          %p855 = scmp.ge.s32.totalorder %s854, 1
          %s859 = sphi %s849, %s849
          %s860 = sphi %s851, %s851
        $region341: #{gru_observation_cell_logvar.1} parent=337 // loop_header_branch
          %857 = sbr.rel (%p855) target = $region345
        $region342: #{gru_observation_cell_logvar.1} parent=337 // loop_body
          %v861 = vld [vmem:[%s859] sm:%s852]
          %862 = vst [vmem:[%s860] sm:%s852] %v861
        $region343: #{gru_observation_cell_logvar.1} parent=337 // loop_footer
          %s858 = sadd.s32 1, %s854
        $region344: #{gru_observation_cell_logvar.1} parent=337 // loop_footer_branch
          %853 = sbr.rel target = $region340
        $region345: #{gru_observation_cell_logvar.1} parent=337 // loop_exit
          _
      $region338: #{gru_observation_cell_logvar.1} parent=322 // pred_fallthru
        _
    $region323: #{gru_observation_cell_logvar.1} parent=1 // pred_fallthru
      _
    // Predicated region
    $region324: #{gru_observation_cell_logvar.1} parent=1 // pred_check
      %p828 = pneg %p824
    $region325: #{gru_observation_cell_logvar.1} parent=1 // pred_check_branch
      %830 = sbr.rel (%p828) target = $region327
    $region326: #{gru_observation_cell_logvar.1} parent=1 // pred_region
      %s831 = sshllo.u32 0, 1
      loop: start=0, step=1, limit=1
      $region328: #{gru_observation_cell_logvar.1} parent=326 // loop_pre_header
        _
      $region329: #{gru_observation_cell_logvar.1} parent=326 // loop_header
        %s833 = sphi 0, %s837
        %p834 = scmp.ge.s32.totalorder %s833, 1
        %s838 = sphi %s246, %s246
        %s839 = sphi %s821, %s821
      $region330: #{gru_observation_cell_logvar.1} parent=326 // loop_header_branch
        %836 = sbr.rel (%p834) target = $region334
      $region331: #{gru_observation_cell_logvar.1} parent=326 // loop_body
        %v840 = vld [vmem:[%s838] sm:%s831]
        %841 = vst [vmem:[%s839] sm:%s831] %v840
      $region332: #{gru_observation_cell_logvar.1} parent=326 // loop_footer
        %s837 = sadd.s32 1, %s833
      $region333: #{gru_observation_cell_logvar.1} parent=326 // loop_footer_branch
        %832 = sbr.rel target = $region329
      $region334: #{gru_observation_cell_logvar.1} parent=326 // loop_exit
        _
    $region327: #{gru_observation_cell_logvar.1} parent=1 // pred_fallthru
      _
    // Predicated region
    $region346: #{gru_observation_cell_logvar.1} parent=1 // pred_check
      _
    $region347: #{gru_observation_cell_logvar.1} parent=1 // pred_check_branch
      %865 = sbr.rel (0) target = $region349
    $region348: #{gru_observation_cell_logvar.1} parent=1 // pred_region
      %866 = vsyncadd %s822, 16
    $region349: #{gru_observation_cell_logvar.1} parent=1 // pred_fallthru
      _
    %s867 = sld [smem:[#allocation5]]
    %s868 = sshll.u32 %s497, 4
    %869 = dma.done [#allocation4], %s868
    %s870 = sld [smem:[#allocation5 + $0x1]]
    %s871 = sshll.u32 %s497, 4
    %872 = dma.done %s681, %s871
    %s873 = sld [smem:[#allocation5 + $0x2]]
    %s874 = sshll.u32 %s497, 4
    %875 = dma.done %s728, %s874
    %s876 = sld [smem:[#allocation5 + $0x3]]
    %s877 = sshll.u32 %s497, 4
    %878 = dma.done %s775, %s877
    %s879 = sld [smem:[#allocation5 + $0x4]]
    %s880 = sshll.u32 %s497, 4
    %881 = dma.done %s822, %s880
    // Predicated region
    $region350: #{gru_observation_cell_logvar.1} parent=1 // pred_check
      _
    $region351: #{gru_observation_cell_logvar.1} parent=1 // pred_check_branch
      %883 = sbr.rel (0) target = $region353
    $region352: #{gru_observation_cell_logvar.1} parent=1 // pred_region
      _
    $region353: #{gru_observation_cell_logvar.1} parent=1 // pred_fallthru
      _
    // Predicated region
    $region354: #{gru_observation_cell_logvar.1} parent=1 // pred_check
      _
    $region355: #{gru_observation_cell_logvar.1} parent=1 // pred_check_branch
      %885 = sbr.rel (0) target = $region357
    $region356: #{gru_observation_cell_logvar.1} parent=1 // pred_region
      _
    $region357: #{gru_observation_cell_logvar.1} parent=1 // pred_fallthru
      _
    %886 = vsyncpa [#allocation6], 1
  %887 = vsyncmov [#allocation3]
  %s888 = vpop.sfrf %887
  %p889 = scmp.eq.s32.totalorder %s888, 0
  %p890 = pneg %p889
  %892 = shalt.err (%p890)
  %s893 = scalar_lea.sflag [#allocation3], 1
  %894 = vsyncmov %s893
  %s895 = vpop.sfrf %894
  %p896 = scmp.eq.s32.totalorder %s895, 0
  %p897 = pneg %p896
  %899 = shalt.err (%p897)
  %s900 = scalar_lea.sflag [#allocation3], 2
  %901 = vsyncmov %s900
  %s902 = vpop.sfrf %901
  %p903 = scmp.eq.s32.totalorder %s902, 0
  %p904 = pneg %p903
  %906 = shalt.err (%p904)
  %s907 = scalar_lea.sflag [#allocation3], 3
  %908 = vsyncmov %s907
  %s909 = vpop.sfrf %908
  %p910 = scmp.eq.s32.totalorder %s909, 0
  %p911 = pneg %p910
  %913 = shalt.err (%p911)
  %s914 = scalar_lea.sflag [#allocation3], 4
  %915 = vsyncmov %s914
  %s916 = vpop.sfrf %915
  %p917 = scmp.eq.s32.totalorder %s916, 0
  %p918 = pneg %p917
  %920 = shalt.err (%p918)
  %921 = vsyncmov [#allocation4]
  %s922 = vpop.sfrf %921
  %p923 = scmp.eq.s32.totalorder %s922, 0
  %p924 = pneg %p923
  %926 = shalt.err (%p924)
  %s927 = scalar_lea.sflag [#allocation4], 1
  %928 = vsyncmov %s927
  %s929 = vpop.sfrf %928
  %p930 = scmp.eq.s32.totalorder %s929, 0
  %p931 = pneg %p930
  %933 = shalt.err (%p931)
  %s934 = scalar_lea.sflag [#allocation4], 2
  %935 = vsyncmov %s934
  %s936 = vpop.sfrf %935
  %p937 = scmp.eq.s32.totalorder %s936, 0
  %p938 = pneg %p937
  %940 = shalt.err (%p938)
  %s941 = scalar_lea.sflag [#allocation4], 3
  %942 = vsyncmov %s941
  %s943 = vpop.sfrf %942
  %p944 = scmp.eq.s32.totalorder %s943, 0
  %p945 = pneg %p944
  %947 = shalt.err (%p945)
  %s948 = scalar_lea.sflag [#allocation4], 4
  %949 = vsyncmov %s948
  %s950 = vpop.sfrf %949
  %p951 = scmp.eq.s32.totalorder %s950, 0
  %p952 = pneg %p951
  %954 = shalt.err (%p952)

</llo_original>
